<compile_context>
chip_gen: v7x
topology: tpu7x:2x2x1
jax: 0.10.0
libtpu: 0.0.40
codegen_flags: <defaults>
</compile_context>

<pallas_src>
import functools

import jax
import jax.numpy as jnp
from jax.experimental import pallas as pl
from jax.experimental.pallas import tpu as pltpu


def node_encoder_kernel(
    feat_ref, neigh_ref, eps_ref,
    w1_ref, b1_ref,
    w2_ref, b2_ref,
    w3a_ref, w3b_ref, b3_ref,
    wmv_ref, bmv_ref,
    mv_out_ref, z_out_ref,
    *, latent_dim,
):
    wdt = w1_ref.dtype  # bf16 weights; activations cast to match for the MXU

    # feat_encode + ReLU
    h1 = jnp.dot(feat_ref[...].astype(wdt), w1_ref[...],
                 preferred_element_type=jnp.float32) + b1_ref[...]
    h1 = jnp.maximum(h1, 0.0)

    # neighbor_encode + ReLU
    h2 = jnp.dot(neigh_ref[...].astype(wdt), w2_ref[...],
                 preferred_element_type=jnp.float32) + b2_ref[...]
    h2 = jnp.maximum(h2, 0.0)

    # latent_encode over concat([h1, h2], dim=1)  (split-weight form) + ReLU
    h3 = (jnp.dot(h1.astype(wdt), w3a_ref[...],
                  preferred_element_type=jnp.float32)
          + jnp.dot(h2.astype(wdt), w3b_ref[...],
                    preferred_element_type=jnp.float32)
          + b3_ref[...])
    h3 = jnp.maximum(h3, 0.0)

    # fused mean|log_var head: one 128-lane-wide matmul
    mv = jnp.dot(h3.astype(wdt), wmv_ref[...],
                 preferred_element_type=jnp.float32) + bmv_ref[...]
    mean = mv[:, :latent_dim]
    log_var = mv[:, latent_dim:]

    # reparameterize: z = mean + eps * exp(0.5 * log_var)
    z = mean + eps_ref[...] * jnp.exp(log_var * 0.5)

    mv_out_ref[...] = mv.astype(mv_out_ref.dtype)
    z_out_ref[...] = z.astype(z_out_ref.dtype)


@functools.partial(jax.jit, static_argnames=("latent_dim", "block_m"))
def node_encoder_forward(feat, neighbor_feat, eps, params, latent_dim,
                         block_m=128):
    N, feat_dim = feat.shape
    (w1, b1, w2, b2, w3a, w3b, b3, wmv, bmv) = params

    # Pad the node axis up to a multiple of block_m (padded rows are sliced off).
    n_pad = (-N) % block_m
    if n_pad:
        feat = jnp.pad(feat, ((0, n_pad), (0, 0)))
        neighbor_feat = jnp.pad(neighbor_feat, ((0, n_pad), (0, 0)))
        eps = jnp.pad(eps, ((0, n_pad), (0, 0)))
    n_padded = N + n_pad
    grid = (n_padded // block_m,)

    def row_spec(cols):           # batched along grid: new tile each step
        return pl.BlockSpec((block_m, cols), lambda i: (i, 0))

    def resident_spec(shape):     # weights/biases: same block every step (VMEM-resident)
        return pl.BlockSpec(shape, lambda i: (0, 0))

    in_specs = [
        row_spec(feat_dim),            # feat
        row_spec(feat_dim),            # neighbor_feat
        row_spec(latent_dim),          # eps
        resident_spec(w1.shape), resident_spec(b1.shape),
        resident_spec(w2.shape), resident_spec(b2.shape),
        resident_spec(w3a.shape), resident_spec(w3b.shape), resident_spec(b3.shape),
        resident_spec(wmv.shape), resident_spec(bmv.shape),
    ]
    out_shapes = (
        jax.ShapeDtypeStruct((n_padded, 2 * latent_dim), jnp.float32),  # mean|log_var
        jax.ShapeDtypeStruct((n_padded, latent_dim), jnp.float32),      # z
    )
    out_specs = (row_spec(2 * latent_dim), row_spec(latent_dim))

    kernel = functools.partial(node_encoder_kernel, latent_dim=latent_dim)

    mv, z = pl.pallas_call(
        kernel,
        grid=grid,
        out_shape=out_shapes,
        in_specs=in_specs,
        out_specs=out_specs,
        compiler_params=pltpu.CompilerParams(
            dimension_semantics=("parallel",),
            vmem_limit_bytes=16 << 20,
        ),
    )(feat, neighbor_feat, eps, w1, b1, w2, b2, w3a, w3b, b3, wmv, bmv)

    mean = mv[:N, :latent_dim]
    log_var = mv[:N, latent_dim:]
    return z[:N], mean, log_var


def init_linear(key, in_features, out_features):
    """PyTorch-style nn.Linear init, weight returned as [in, out] (pre-transposed)."""
    kw, kb = jax.random.split(key)
    bound = 1.0 / (in_features ** 0.5)
    w = jax.random.uniform(kw, (in_features, out_features), jnp.float32,
                           minval=-bound, maxval=bound)
    b = jax.random.uniform(kb, (1, out_features), jnp.float32,
                           minval=-bound, maxval=bound)
    return w, b


if __name__ == "__main__":
    # Module default dims (already TPU-aligned); batch big enough to exercise
    # the grid (grid = (2,) with block_m=128) while staying small.
    FEAT_DIM, HIDDEN_DIM, REPARAM_DIM, LATENT_DIM = 512, 256, 128, 64
    N = 256

    root = jax.random.PRNGKey(0)
    k_feat, k_neigh, k_eps, k1, k2, k3, k4, k5 = jax.random.split(root, 8)

    feat = jax.random.normal(k_feat, (N, FEAT_DIM), jnp.float32)
    neighbor_feat = jax.random.normal(k_neigh, (N, FEAT_DIM), jnp.float32)
    # TODO(synk): eps is drawn host-side (torch.randn_like equivalent) rather
    # than with the in-kernel PRNG (pltpu.prng_seed/stateful_normal); the
    # reparameterization math itself is in-kernel.
    eps = jax.random.normal(k_eps, (N, LATENT_DIM), jnp.float32)

    w1, b1 = init_linear(k1, FEAT_DIM, HIDDEN_DIM)          # feat_encode
    w2, b2 = init_linear(k2, FEAT_DIM, HIDDEN_DIM)          # neighbor_encode
    w3, b3 = init_linear(k3, 2 * HIDDEN_DIM, REPARAM_DIM)   # latent_encode
    wm, bm = init_linear(k4, REPARAM_DIM, LATENT_DIM)       # mean
    wv, bv = init_linear(k5, REPARAM_DIM, LATENT_DIM)       # log_var

    # bf16 weights (halves weight HBM traffic; f32 accumulation preserved).
    wdt = jnp.bfloat16
    w1b, w2b = w1.astype(wdt), w2.astype(wdt)
    w3ab, w3bb = w3[:HIDDEN_DIM].astype(wdt), w3[HIDDEN_DIM:].astype(wdt)
    # Fused mean|log_var head weight/bias.
    wmv = jnp.concatenate([wm, wv], axis=1).astype(wdt)     # (128, 128)
    bmv = jnp.concatenate([bm, bv], axis=1)                 # (1, 128), f32

    params = (w1b, b1, w2b, b2, w3ab, w3bb, b3, wmv, bmv)

    z, mean, log_var = node_encoder_forward(
        feat, neighbor_feat, eps, params, latent_dim=LATENT_DIM)
    jax.block_until_ready((z, mean, log_var))

    # --- Reference 1: same precision as the kernel (bf16 weights/activations,
    # f32 accumulation) -> tight tolerance.
    def dotf32(a, w):
        return jnp.dot(a.astype(wdt), w, preferred_element_type=jnp.float32)

    h1 = jax.nn.relu(dotf32(feat, w1b) + b1)
    h2 = jax.nn.relu(dotf32(neighbor_feat, w2b) + b2)
    h3 = jax.nn.relu(dotf32(h1, w3ab) + dotf32(h2, w3bb) + b3)
    mv_ref = dotf32(h3, wmv) + bmv
    mean_ref = mv_ref[:, :LATENT_DIM]
    logvar_ref = mv_ref[:, LATENT_DIM:]
    z_ref = mean_ref + eps * jnp.exp(0.5 * logvar_ref)

    assert jnp.allclose(mean, mean_ref, atol=1e-3, rtol=1e-3)
    assert jnp.allclose(log_var, logvar_ref, atol=1e-3, rtol=1e-3)
    assert jnp.allclose(z, z_ref, atol=1e-3, rtol=1e-3)

    # --- Reference 2: full f32 math (loose tolerance, bf16 weight quantization).
    h1f = jax.nn.relu(feat @ w1 + b1)
    h2f = jax.nn.relu(neighbor_feat @ w2 + b2)
    h3f = jax.nn.relu(jnp.concatenate([h1f, h2f], axis=1) @ w3 + b3)
    mean_f = h3f @ wm + bm
    logvar_f = h3f @ wv + bv
    z_f = mean_f + eps * jnp.exp(0.5 * logvar_f)
    assert jnp.allclose(mean, mean_f, atol=1e-1, rtol=1e-1)
    assert jnp.allclose(log_var, logvar_f, atol=1e-1, rtol=1e-1)
    assert jnp.allclose(z, z_f, atol=1e-1, rtol=1e-1)

    print("KERNEL_OK")
</pallas_src>

<mosaic_0001>
module attributes {stable_mosaic.version = 11 : i64} {
  func.func @node_encoder_kernel(%arg0: i32, %arg1: memref<128x512xf32, #tpu.memory_space<vmem>>, %arg2: memref<128x512xf32, #tpu.memory_space<vmem>>, %arg3: memref<128x64xf32, #tpu.memory_space<vmem>>, %arg4: memref<512x256xbf16, #tpu.memory_space<vmem>>, %arg5: memref<1x256xf32, #tpu.memory_space<vmem>>, %arg6: memref<512x256xbf16, #tpu.memory_space<vmem>>, %arg7: memref<1x256xf32, #tpu.memory_space<vmem>>, %arg8: memref<256x128xbf16, #tpu.memory_space<vmem>>, %arg9: memref<256x128xbf16, #tpu.memory_space<vmem>>, %arg10: memref<1x128xf32, #tpu.memory_space<vmem>>, %arg11: memref<128x128xbf16, #tpu.memory_space<vmem>>, %arg12: memref<1x128xf32, #tpu.memory_space<vmem>>, %arg13: memref<128x128xf32, #tpu.memory_space<vmem>>, %arg14: memref<128x64xf32, #tpu.memory_space<vmem>>) attributes {dimension_semantics = [#tpu.dimension_semantics<parallel>], iteration_bounds = array<i64: 2>, scalar_prefetch = 0 : i64, scratch_operands = 0 : i64, tpu.core_type = #tpu.core_type<tc>, window_params = [{transform_indices = @transform_0, window_bounds = array<i64: 128, 512>}, {transform_indices = @transform_1, window_bounds = array<i64: 128, 512>}, {transform_indices = @transform_2, window_bounds = array<i64: 128, 64>}, {pipeline_mode = #tpu.pipeline_mode<synchronous>, transform_indices = @transform_3, window_bounds = array<i64: 512, 256>}, {pipeline_mode = #tpu.pipeline_mode<synchronous>, transform_indices = @transform_4, window_bounds = array<i64: 1, 256>}, {pipeline_mode = #tpu.pipeline_mode<synchronous>, transform_indices = @transform_5, window_bounds = array<i64: 512, 256>}, {pipeline_mode = #tpu.pipeline_mode<synchronous>, transform_indices = @transform_6, window_bounds = array<i64: 1, 256>}, {pipeline_mode = #tpu.pipeline_mode<synchronous>, transform_indices = @transform_7, window_bounds = array<i64: 256, 128>}, {pipeline_mode = #tpu.pipeline_mode<synchronous>, transform_indices = @transform_8, window_bounds = array<i64: 256, 128>}, {pipeline_mode = #tpu.pipeline_mode<synchronous>, transform_indices = @transform_9, window_bounds = array<i64: 1, 128>}, {pipeline_mode = #tpu.pipeline_mode<synchronous>, transform_indices = @transform_10, window_bounds = array<i64: 128, 128>}, {pipeline_mode = #tpu.pipeline_mode<synchronous>, transform_indices = @transform_11, window_bounds = array<i64: 1, 128>}, {transform_indices = @transform_12, window_bounds = array<i64: 128, 128>}, {transform_indices = @transform_13, window_bounds = array<i64: 128, 64>}]} {
    %c0 = arith.constant 0 : index
    %c0_0 = arith.constant 0 : index
    %0 = vector.load %arg1[%c0, %c0_0] : memref<128x512xf32, #tpu.memory_space<vmem>>, vector<128x512xf32>
    %1 = arith.truncf %0 : vector<128x512xf32> to vector<128x512xbf16>
    %c0_1 = arith.constant 0 : index
    %c0_2 = arith.constant 0 : index
    %2 = vector.load %arg4[%c0_1, %c0_2] : memref<512x256xbf16, #tpu.memory_space<vmem>>, vector<512x256xbf16>
    %cst = arith.constant dense<0.000000e+00> : vector<128x256xf32>
    %3 = tpu.matmul %1, %2, %cst {dimension_numbers = #tpu.dot_dimension_numbers<[1], [0], [0], [1], [0, 0, 1, 1], [], []>} : vector<128x512xbf16>, vector<512x256xbf16>, vector<128x256xf32> -> vector<128x256xf32>
    %c0_3 = arith.constant 0 : index
    %c0_4 = arith.constant 0 : index
    %4 = vector.load %arg5[%c0_3, %c0_4] : memref<1x256xf32, #tpu.memory_space<vmem>>, vector<1x256xf32>
    %5 = vector.broadcast %4 : vector<1x256xf32> to vector<128x256xf32>
    %6 = arith.addf %3, %5 : vector<128x256xf32>
    %cst_5 = arith.constant 0.000000e+00 : f32
    %7 = vector.broadcast %cst_5 : f32 to vector<128x256xf32>
    %8 = arith.maximumf %6, %7 : vector<128x256xf32>
    %c0_6 = arith.constant 0 : index
    %c0_7 = arith.constant 0 : index
    %9 = vector.load %arg2[%c0_6, %c0_7] : memref<128x512xf32, #tpu.memory_space<vmem>>, vector<128x512xf32>
    %10 = arith.truncf %9 : vector<128x512xf32> to vector<128x512xbf16>
    %c0_8 = arith.constant 0 : index
    %c0_9 = arith.constant 0 : index
    %11 = vector.load %arg6[%c0_8, %c0_9] : memref<512x256xbf16, #tpu.memory_space<vmem>>, vector<512x256xbf16>
    %cst_10 = arith.constant dense<0.000000e+00> : vector<128x256xf32>
    %12 = tpu.matmul %10, %11, %cst_10 {dimension_numbers = #tpu.dot_dimension_numbers<[1], [0], [0], [1], [0, 0, 1, 1], [], []>} : vector<128x512xbf16>, vector<512x256xbf16>, vector<128x256xf32> -> vector<128x256xf32>
    %c0_11 = arith.constant 0 : index
    %c0_12 = arith.constant 0 : index
    %13 = vector.load %arg7[%c0_11, %c0_12] : memref<1x256xf32, #tpu.memory_space<vmem>>, vector<1x256xf32>
    %14 = vector.broadcast %13 : vector<1x256xf32> to vector<128x256xf32>
    %15 = arith.addf %12, %14 : vector<128x256xf32>
    %cst_13 = arith.constant 0.000000e+00 : f32
    %16 = vector.broadcast %cst_13 : f32 to vector<128x256xf32>
    %17 = arith.maximumf %15, %16 : vector<128x256xf32>
    %18 = arith.truncf %8 : vector<128x256xf32> to vector<128x256xbf16>
    %c0_14 = arith.constant 0 : index
    %c0_15 = arith.constant 0 : index
    %19 = vector.load %arg8[%c0_14, %c0_15] : memref<256x128xbf16, #tpu.memory_space<vmem>>, vector<256x128xbf16>
    %cst_16 = arith.constant dense<0.000000e+00> : vector<128x128xf32>
    %20 = tpu.matmul %18, %19, %cst_16 {dimension_numbers = #tpu.dot_dimension_numbers<[1], [0], [0], [1], [0, 0, 1, 1], [], []>} : vector<128x256xbf16>, vector<256x128xbf16>, vector<128x128xf32> -> vector<128x128xf32>
    %21 = arith.truncf %17 : vector<128x256xf32> to vector<128x256xbf16>
    %c0_17 = arith.constant 0 : index
    %c0_18 = arith.constant 0 : index
    %22 = vector.load %arg9[%c0_17, %c0_18] : memref<256x128xbf16, #tpu.memory_space<vmem>>, vector<256x128xbf16>
    %cst_19 = arith.constant dense<0.000000e+00> : vector<128x128xf32>
    %23 = tpu.matmul %21, %22, %cst_19 {dimension_numbers = #tpu.dot_dimension_numbers<[1], [0], [0], [1], [0, 0, 1, 1], [], []>} : vector<128x256xbf16>, vector<256x128xbf16>, vector<128x128xf32> -> vector<128x128xf32>
    %24 = arith.addf %20, %23 : vector<128x128xf32>
    %c0_20 = arith.constant 0 : index
    %c0_21 = arith.constant 0 : index
    %25 = vector.load %arg10[%c0_20, %c0_21] : memref<1x128xf32, #tpu.memory_space<vmem>>, vector<1x128xf32>
    %26 = vector.broadcast %25 : vector<1x128xf32> to vector<128x128xf32>
    %27 = arith.addf %24, %26 : vector<128x128xf32>
    %cst_22 = arith.constant 0.000000e+00 : f32
    %28 = vector.broadcast %cst_22 : f32 to vector<128x128xf32>
    %29 = arith.maximumf %27, %28 : vector<128x128xf32>
    %30 = arith.truncf %29 : vector<128x128xf32> to vector<128x128xbf16>
    %c0_23 = arith.constant 0 : index
    %c0_24 = arith.constant 0 : index
    %31 = vector.load %arg11[%c0_23, %c0_24] : memref<128x128xbf16, #tpu.memory_space<vmem>>, vector<128x128xbf16>
    %cst_25 = arith.constant dense<0.000000e+00> : vector<128x128xf32>
    %32 = tpu.matmul %30, %31, %cst_25 {dimension_numbers = #tpu.dot_dimension_numbers<[1], [0], [0], [1], [0, 0, 1, 1], [], []>} : vector<128x128xbf16>, vector<128x128xbf16>, vector<128x128xf32> -> vector<128x128xf32>
    %c0_26 = arith.constant 0 : index
    %c0_27 = arith.constant 0 : index
    %33 = vector.load %arg12[%c0_26, %c0_27] : memref<1x128xf32, #tpu.memory_space<vmem>>, vector<1x128xf32>
    %34 = vector.broadcast %33 : vector<1x128xf32> to vector<128x128xf32>
    %35 = arith.addf %32, %34 : vector<128x128xf32>
    %36 = vector.extract_strided_slice %35 {offsets = [0, 0], sizes = [128, 64], strides = [1, 1]} : vector<128x128xf32> to vector<128x64xf32>
    %37 = vector.extract_strided_slice %35 {offsets = [0, 64], sizes = [128, 64], strides = [1, 1]} : vector<128x128xf32> to vector<128x64xf32>
    %c0_28 = arith.constant 0 : index
    %c0_29 = arith.constant 0 : index
    %38 = vector.load %arg3[%c0_28, %c0_29] : memref<128x64xf32, #tpu.memory_space<vmem>>, vector<128x64xf32>
    %cst_30 = arith.constant 5.000000e-01 : f32
    %39 = vector.broadcast %cst_30 : f32 to vector<128x64xf32>
    %40 = arith.mulf %37, %39 : vector<128x64xf32>
    %41 = math.exp %40 : vector<128x64xf32>
    %42 = arith.mulf %38, %41 : vector<128x64xf32>
    %43 = arith.addf %36, %42 : vector<128x64xf32>
    %c0_31 = arith.constant 0 : index
    %c0_32 = arith.constant 0 : index
    %44 = vector.load %arg13[%c0_31, %c0_32] : memref<128x128xf32, #tpu.memory_space<vmem>>, vector<128x128xf32>
    tpu.vector_store %arg13[%c0_31, %c0_32], %35 {strides = array<i32>} : memref<128x128xf32, #tpu.memory_space<vmem>>, vector<128x128xf32>,
    %c0_33 = arith.constant 0 : index
    %c0_34 = arith.constant 0 : index
    %45 = vector.load %arg14[%c0_33, %c0_34] : memref<128x64xf32, #tpu.memory_space<vmem>>, vector<128x64xf32>
    tpu.vector_store %arg14[%c0_33, %c0_34], %43 {strides = array<i32>} : memref<128x64xf32, #tpu.memory_space<vmem>>, vector<128x64xf32>,
    return
  }
  func.func @transform_0(%arg0: i32) -> (i32, i32) {
    %c0_i32 = arith.constant 0 : i32
    %c0_i32_0 = arith.constant 0 : i32
    return %arg0, %c0_i32 : i32, i32
  }
  func.func @transform_1(%arg0: i32) -> (i32, i32) {
    %c0_i32 = arith.constant 0 : i32
    %c0_i32_0 = arith.constant 0 : i32
    return %arg0, %c0_i32 : i32, i32
  }
  func.func @transform_2(%arg0: i32) -> (i32, i32) {
    %c0_i32 = arith.constant 0 : i32
    %c0_i32_0 = arith.constant 0 : i32
    return %arg0, %c0_i32 : i32, i32
  }
  func.func @transform_3(%arg0: i32) -> (i32, i32) {
    %c0_i32 = arith.constant 0 : i32
    %c0_i32_0 = arith.constant 0 : i32
    %c0_i32_1 = arith.constant 0 : i32
    return %c0_i32, %c0_i32_0 : i32, i32
  }
  func.func @transform_4(%arg0: i32) -> (i32, i32) {
    %c0_i32 = arith.constant 0 : i32
    %c0_i32_0 = arith.constant 0 : i32
    %c0_i32_1 = arith.constant 0 : i32
    return %c0_i32, %c0_i32_0 : i32, i32
  }
  func.func @transform_5(%arg0: i32) -> (i32, i32) {
    %c0_i32 = arith.constant 0 : i32
    %c0_i32_0 = arith.constant 0 : i32
    %c0_i32_1 = arith.constant 0 : i32
    return %c0_i32, %c0_i32_0 : i32, i32
  }
  func.func @transform_6(%arg0: i32) -> (i32, i32) {
    %c0_i32 = arith.constant 0 : i32
    %c0_i32_0 = arith.constant 0 : i32
    %c0_i32_1 = arith.constant 0 : i32
    return %c0_i32, %c0_i32_0 : i32, i32
  }
  func.func @transform_7(%arg0: i32) -> (i32, i32) {
    %c0_i32 = arith.constant 0 : i32
    %c0_i32_0 = arith.constant 0 : i32
    %c0_i32_1 = arith.constant 0 : i32
    return %c0_i32, %c0_i32_0 : i32, i32
  }
  func.func @transform_8(%arg0: i32) -> (i32, i32) {
    %c0_i32 = arith.constant 0 : i32
    %c0_i32_0 = arith.constant 0 : i32
    %c0_i32_1 = arith.constant 0 : i32
    return %c0_i32, %c0_i32_0 : i32, i32
  }
  func.func @transform_9(%arg0: i32) -> (i32, i32) {
    %c0_i32 = arith.constant 0 : i32
    %c0_i32_0 = arith.constant 0 : i32
    %c0_i32_1 = arith.constant 0 : i32
    return %c0_i32, %c0_i32_0 : i32, i32
  }
  func.func @transform_10(%arg0: i32) -> (i32, i32) {
    %c0_i32 = arith.constant 0 : i32
    %c0_i32_0 = arith.constant 0 : i32
    %c0_i32_1 = arith.constant 0 : i32
    return %c0_i32, %c0_i32_0 : i32, i32
  }
  func.func @transform_11(%arg0: i32) -> (i32, i32) {
    %c0_i32 = arith.constant 0 : i32
    %c0_i32_0 = arith.constant 0 : i32
    %c0_i32_1 = arith.constant 0 : i32
    return %c0_i32, %c0_i32_0 : i32, i32
  }
  func.func @transform_12(%arg0: i32) -> (i32, i32) {
    %c0_i32 = arith.constant 0 : i32
    %c0_i32_0 = arith.constant 0 : i32
    return %arg0, %c0_i32 : i32, i32
  }
  func.func @transform_13(%arg0: i32) -> (i32, i32) {
    %c0_i32 = arith.constant 0 : i32
    %c0_i32_0 = arith.constant 0 : i32
    return %arg0, %c0_i32 : i32, i32
  }
}

</mosaic_0001>

<llo_original>
// kernel: node_encoder_forward.1
$region0: #{node_encoder_forward.1}
  #allocation0 [shape = 'u32[]', space=smem, size = 0x4, offset = 0x4, fixed_abs, tag = 'smem constant byte address 0x4 - core index']
  #allocation1 [shape = 'u32[144,128]{1,0:T(1,128)}', space=vmem, size = 0x12000, scoped, tag = 'internal scratch']
  %s0 = inlined_call_operand.hbm [shape: f32[256,512], index: 0, kind: input, shape index: {}]
  %s1 = inlined_call_operand.hbm [shape: f32[256,512], index: 1, kind: input, shape index: {}]
  %s2 = inlined_call_operand.vmem [shape: f32[256,64], index: 2, kind: input, shape index: {}]
  %s3 = inlined_call_operand.hbm [shape: bf16[512,256], index: 3, kind: input, shape index: {}]
  %s4 = inlined_call_operand.vmem [shape: f32[1,256], index: 4, kind: input, shape index: {}]
  %s5 = inlined_call_operand.hbm [shape: bf16[512,256], index: 5, kind: input, shape index: {}]
  %s6 = inlined_call_operand.vmem [shape: f32[1,256], index: 6, kind: input, shape index: {}]
  %s7 = inlined_call_operand.vmem [shape: bf16[256,128], index: 7, kind: input, shape index: {}]
  %s8 = inlined_call_operand.vmem [shape: bf16[256,128], index: 8, kind: input, shape index: {}]
  %s9 = inlined_call_operand.vmem [shape: f32[1,128], index: 9, kind: input, shape index: {}]
  %s10 = inlined_call_operand.vmem [shape: bf16[128,128], index: 10, kind: input, shape index: {}]
  %s11 = inlined_call_operand.vmem [shape: f32[1,128], index: 11, kind: input, shape index: {}]
  %s12 = inlined_call_operand.vmem [shape: f32[256,128], index: 12, kind: output, shape index: {0}]
  %s13 = inlined_call_operand.vmem [shape: f32[256,64], index: 13, kind: output, shape index: {1}]
  %14 = xla_tuple %s12, %s13
  %s15 = sld [smem:[#allocation0]]
  $region105: #{node_encoder_forward.1} parent=0
    _
  %s17 = ssub.s32 1, %s15
  %s18 = scalar_select 0, %s17, %s15
  $region1: #{node_encoder_forward.1} parent=0
    #allocation2 [shape = 'u8[524288]{0}', space=vmem, size = 0x80000, scoped, tag = 'input window, operand 0']
    #allocation3 [shape = 's32[2]{0}', space=sflag, size = 0x8, scoped, tag = 'scoped memory for node_encoder_forward.1']
    #allocation4 [shape = 'u8[524288]{0}', space=vmem, size = 0x80000, scoped, tag = 'input window, operand 1']
    #allocation5 [shape = 's32[2]{0}', space=sflag, size = 0x8, scoped, tag = 'scoped memory for node_encoder_forward.1']
    #allocation6 [shape = 'u8[262144]{0}', space=vmem, size = 0x40000, scoped, tag = 'input window, operand 3, single buffered']
    #allocation7 [shape = 'u8[262144]{0}', space=vmem, size = 0x40000, scoped, tag = 'input window, operand 5, single buffered']
    #allocation8 [shape = 's32[1]{0}', space=sflag, size = 0x4, scoped, tag = 'scoped memory for node_encoder_forward.1']
    %19 = vsyncpa [#allocation3], 0
    %s20 = scalar_lea.sflag [#allocation3], 1
    %21 = vsyncpa %s20, 0
    %22 = vsyncpa [#allocation5], 0
    %s23 = scalar_lea.sflag [#allocation5], 1
    %24 = vsyncpa %s23, 0
    %25 = vsyncpa [#allocation8], 0
    loop: start=0, step=1, limit=4
    $region2: #{node_encoder_forward.1} parent=1 // loop_pre_header
      _
    $region3: #{node_encoder_forward.1} parent=1 // loop_header
      %s27 = sphi 0, %s31
      %p28 = scmp.ge.s32.totalorder %s27, 4
      %s37 = sphi 0, %s39
      %s40 = sphi 0, %s37
      %s41 = sphi 0, %s40
      %s57 = sphi 0, %s41
      %s63 = sphi 0, %s65
      %s66 = sphi 0, %s63
      %s67 = sphi 0, %s66
      %s83 = sphi 0, %s67
      %s89 = sphi 0, %s91
      %s92 = sphi 0, %s89
      %s93 = sphi 0, %s92
      %s109 = sphi 0, %s93
      %s113 = sphi 0, %s113
      %s115 = sphi 0, %s113
      %s116 = sphi 0, %s115
      %s130 = sphi 0, %s116
      %s134 = sphi 0, %s134
      %s136 = sphi 0, %s134
      %s137 = sphi 0, %s136
      %s151 = sphi 0, %s137
      %s155 = sphi 0, %s155
      %s157 = sphi 0, %s155
      %s158 = sphi 0, %s157
      %s172 = sphi 0, %s158
      %s176 = sphi 0, %s176
      %s178 = sphi 0, %s176
      %s179 = sphi 0, %s178
      %s193 = sphi 0, %s179
      %s197 = sphi 0, %s197
      %s199 = sphi 0, %s197
      %s200 = sphi 0, %s199
      %s214 = sphi 0, %s200
      %s218 = sphi 0, %s218
      %s220 = sphi 0, %s218
      %s221 = sphi 0, %s220
      %s235 = sphi 0, %s221
      %s239 = sphi 0, %s239
      %s241 = sphi 0, %s239
      %s242 = sphi 0, %s241
      %s256 = sphi 0, %s242
      %s260 = sphi 0, %s260
      %s262 = sphi 0, %s260
      %s263 = sphi 0, %s262
      %s277 = sphi 0, %s263
      %s281 = sphi 0, %s281
      %s283 = sphi 0, %s281
      %s284 = sphi 0, %s283
      %s298 = sphi 0, %s284
      %s304 = sphi 0, %s306
      %s307 = sphi 0, %s304
      %s308 = sphi 0, %s307
      %s324 = sphi 0, %s308
      %s330 = sphi 0, %s332
      %s333 = sphi 0, %s330
      %s334 = sphi 0, %s333
      %s350 = sphi 0, %s334
    $region4: #{node_encoder_forward.1} parent=1 // loop_header_branch
      %30 = sbr.rel (%p28) target = $region8
    $region5: #{node_encoder_forward.1} parent=1 // loop_body
      %s32 = ssub.s32 %s27, 1
      %s33 = ssub.s32 %s27, 2
      %s34 = sadd.s32 %s27, 1
      %s35 = ssub.s32 %s27, %s34
      %p36 = scmp.eq.s32.totalorder %s35, 0
      %s38 = sadd.s32 %s37, 1
      %s39 = scalar_select %p36, %s37, %s38
      %p42 = pneg %p36
      %p43 = scmp.eq.s32.totalorder %s27, 1
      %p44 = por %p42, %p43
      %p45 = scmp.ne.s32.totalorder %s37, %s40
      %p46 = scmp.eq.s32.totalorder %s27, 0
      %p47 = por %p45, %p46
      %p48 = scmp.ne.s32.totalorder %s37, %s40
      %p49 = scmp.eq.s32.totalorder %s32, 1
      %p50 = por %p48, %p49
      %p51 = scmp.ne.s32.totalorder %s40, %s41
      %p52 = scmp.eq.s32.totalorder %s32, 0
      %p53 = por %p51, %p52
      %p54 = scmp.ne.s32.totalorder %s40, %s41
      %p55 = scmp.eq.s32.totalorder %s33, 1
      %p56 = por %p54, %p55
      %p58 = scmp.ne.s32.totalorder %s41, %s57
      %p59 = scmp.eq.s32.totalorder %s33, 0
      %p60 = por %p58, %p59
      %s61 = ssub.s32 %s27, %s34
      %p62 = scmp.eq.s32.totalorder %s61, 0
      %s64 = sadd.s32 %s63, 1
      %s65 = scalar_select %p62, %s63, %s64
      %p68 = pneg %p62
      %p69 = scmp.eq.s32.totalorder %s27, 1
      %p70 = por %p68, %p69
      %p71 = scmp.ne.s32.totalorder %s63, %s66
      %p72 = scmp.eq.s32.totalorder %s27, 0
      %p73 = por %p71, %p72
      %p74 = scmp.ne.s32.totalorder %s63, %s66
      %p75 = scmp.eq.s32.totalorder %s32, 1
      %p76 = por %p74, %p75
      %p77 = scmp.ne.s32.totalorder %s66, %s67
      %p78 = scmp.eq.s32.totalorder %s32, 0
      %p79 = por %p77, %p78
      %p80 = scmp.ne.s32.totalorder %s66, %s67
      %p81 = scmp.eq.s32.totalorder %s33, 1
      %p82 = por %p80, %p81
      %p84 = scmp.ne.s32.totalorder %s67, %s83
      %p85 = scmp.eq.s32.totalorder %s33, 0
      %p86 = por %p84, %p85
      %s87 = ssub.s32 %s27, %s34
      %p88 = scmp.eq.s32.totalorder %s87, 0
      %s90 = sadd.s32 %s89, 1
      %s91 = scalar_select %p88, %s89, %s90
      %p94 = pneg %p88
      %p95 = scmp.eq.s32.totalorder %s27, 1
      %p96 = por %p94, %p95
      %p97 = scmp.ne.s32.totalorder %s89, %s92
      %p98 = scmp.eq.s32.totalorder %s27, 0
      %p99 = por %p97, %p98
      %p100 = scmp.ne.s32.totalorder %s89, %s92
      %p101 = scmp.eq.s32.totalorder %s32, 1
      %p102 = por %p100, %p101
      %p103 = scmp.ne.s32.totalorder %s92, %s93
      %p104 = scmp.eq.s32.totalorder %s32, 0
      %p105 = por %p103, %p104
      %p106 = scmp.ne.s32.totalorder %s92, %s93
      %p107 = scmp.eq.s32.totalorder %s33, 1
      %p108 = por %p106, %p107
      %p110 = scmp.ne.s32.totalorder %s93, %s109
      %p111 = scmp.eq.s32.totalorder %s33, 0
      %p112 = por %p110, %p111
      %s114 = sadd.s32 %s113, 1
      %p117 = scmp.eq.s32.totalorder %s27, 1
      %p118 = scmp.ne.s32.totalorder %s113, %s115
      %p119 = scmp.eq.s32.totalorder %s27, 0
      %p120 = por %p118, %p119
      %p121 = scmp.ne.s32.totalorder %s113, %s115
      %p122 = scmp.eq.s32.totalorder %s32, 1
      %p123 = por %p121, %p122
      %p124 = scmp.ne.s32.totalorder %s115, %s116
      %p125 = scmp.eq.s32.totalorder %s32, 0
      %p126 = por %p124, %p125
      %p127 = scmp.ne.s32.totalorder %s115, %s116
      %p128 = scmp.eq.s32.totalorder %s33, 1
      %p129 = por %p127, %p128
      %p131 = scmp.ne.s32.totalorder %s116, %s130
      %p132 = scmp.eq.s32.totalorder %s33, 0
      %p133 = por %p131, %p132
      %s135 = sadd.s32 %s134, 1
      %p138 = scmp.eq.s32.totalorder %s27, 1
      %p139 = scmp.ne.s32.totalorder %s134, %s136
      %p140 = scmp.eq.s32.totalorder %s27, 0
      %p141 = por %p139, %p140
      %p142 = scmp.ne.s32.totalorder %s134, %s136
      %p143 = scmp.eq.s32.totalorder %s32, 1
      %p144 = por %p142, %p143
      %p145 = scmp.ne.s32.totalorder %s136, %s137
      %p146 = scmp.eq.s32.totalorder %s32, 0
      %p147 = por %p145, %p146
      %p148 = scmp.ne.s32.totalorder %s136, %s137
      %p149 = scmp.eq.s32.totalorder %s33, 1
      %p150 = por %p148, %p149
      %p152 = scmp.ne.s32.totalorder %s137, %s151
      %p153 = scmp.eq.s32.totalorder %s33, 0
      %p154 = por %p152, %p153
      %s156 = sadd.s32 %s155, 1
      %p159 = scmp.eq.s32.totalorder %s27, 1
      %p160 = scmp.ne.s32.totalorder %s155, %s157
      %p161 = scmp.eq.s32.totalorder %s27, 0
      %p162 = por %p160, %p161
      %p163 = scmp.ne.s32.totalorder %s155, %s157
      %p164 = scmp.eq.s32.totalorder %s32, 1
      %p165 = por %p163, %p164
      %p166 = scmp.ne.s32.totalorder %s157, %s158
      %p167 = scmp.eq.s32.totalorder %s32, 0
      %p168 = por %p166, %p167
      %p169 = scmp.ne.s32.totalorder %s157, %s158
      %p170 = scmp.eq.s32.totalorder %s33, 1
      %p171 = por %p169, %p170
      %p173 = scmp.ne.s32.totalorder %s158, %s172
      %p174 = scmp.eq.s32.totalorder %s33, 0
      %p175 = por %p173, %p174
      %s177 = sadd.s32 %s176, 1
      %p180 = scmp.eq.s32.totalorder %s27, 1
      %p181 = scmp.ne.s32.totalorder %s176, %s178
      %p182 = scmp.eq.s32.totalorder %s27, 0
      %p183 = por %p181, %p182
      %p184 = scmp.ne.s32.totalorder %s176, %s178
      %p185 = scmp.eq.s32.totalorder %s32, 1
      %p186 = por %p184, %p185
      %p187 = scmp.ne.s32.totalorder %s178, %s179
      %p188 = scmp.eq.s32.totalorder %s32, 0
      %p189 = por %p187, %p188
      %p190 = scmp.ne.s32.totalorder %s178, %s179
      %p191 = scmp.eq.s32.totalorder %s33, 1
      %p192 = por %p190, %p191
      %p194 = scmp.ne.s32.totalorder %s179, %s193
      %p195 = scmp.eq.s32.totalorder %s33, 0
      %p196 = por %p194, %p195
      %s198 = sadd.s32 %s197, 1
      %p201 = scmp.eq.s32.totalorder %s27, 1
      %p202 = scmp.ne.s32.totalorder %s197, %s199
      %p203 = scmp.eq.s32.totalorder %s27, 0
      %p204 = por %p202, %p203
      %p205 = scmp.ne.s32.totalorder %s197, %s199
      %p206 = scmp.eq.s32.totalorder %s32, 1
      %p207 = por %p205, %p206
      %p208 = scmp.ne.s32.totalorder %s199, %s200
      %p209 = scmp.eq.s32.totalorder %s32, 0
      %p210 = por %p208, %p209
      %p211 = scmp.ne.s32.totalorder %s199, %s200
      %p212 = scmp.eq.s32.totalorder %s33, 1
      %p213 = por %p211, %p212
      %p215 = scmp.ne.s32.totalorder %s200, %s214
      %p216 = scmp.eq.s32.totalorder %s33, 0
      %p217 = por %p215, %p216
      %s219 = sadd.s32 %s218, 1
      %p222 = scmp.eq.s32.totalorder %s27, 1
      %p223 = scmp.ne.s32.totalorder %s218, %s220
      %p224 = scmp.eq.s32.totalorder %s27, 0
      %p225 = por %p223, %p224
      %p226 = scmp.ne.s32.totalorder %s218, %s220
      %p227 = scmp.eq.s32.totalorder %s32, 1
      %p228 = por %p226, %p227
      %p229 = scmp.ne.s32.totalorder %s220, %s221
      %p230 = scmp.eq.s32.totalorder %s32, 0
      %p231 = por %p229, %p230
      %p232 = scmp.ne.s32.totalorder %s220, %s221
      %p233 = scmp.eq.s32.totalorder %s33, 1
      %p234 = por %p232, %p233
      %p236 = scmp.ne.s32.totalorder %s221, %s235
      %p237 = scmp.eq.s32.totalorder %s33, 0
      %p238 = por %p236, %p237
      %s240 = sadd.s32 %s239, 1
      %p243 = scmp.eq.s32.totalorder %s27, 1
      %p244 = scmp.ne.s32.totalorder %s239, %s241
      %p245 = scmp.eq.s32.totalorder %s27, 0
      %p246 = por %p244, %p245
      %p247 = scmp.ne.s32.totalorder %s239, %s241
      %p248 = scmp.eq.s32.totalorder %s32, 1
      %p249 = por %p247, %p248
      %p250 = scmp.ne.s32.totalorder %s241, %s242
      %p251 = scmp.eq.s32.totalorder %s32, 0
      %p252 = por %p250, %p251
      %p253 = scmp.ne.s32.totalorder %s241, %s242
      %p254 = scmp.eq.s32.totalorder %s33, 1
      %p255 = por %p253, %p254
      %p257 = scmp.ne.s32.totalorder %s242, %s256
      %p258 = scmp.eq.s32.totalorder %s33, 0
      %p259 = por %p257, %p258
      %s261 = sadd.s32 %s260, 1
      %p264 = scmp.eq.s32.totalorder %s27, 1
      %p265 = scmp.ne.s32.totalorder %s260, %s262
      %p266 = scmp.eq.s32.totalorder %s27, 0
      %p267 = por %p265, %p266
      %p268 = scmp.ne.s32.totalorder %s260, %s262
      %p269 = scmp.eq.s32.totalorder %s32, 1
      %p270 = por %p268, %p269
      %p271 = scmp.ne.s32.totalorder %s262, %s263
      %p272 = scmp.eq.s32.totalorder %s32, 0
      %p273 = por %p271, %p272
      %p274 = scmp.ne.s32.totalorder %s262, %s263
      %p275 = scmp.eq.s32.totalorder %s33, 1
      %p276 = por %p274, %p275
      %p278 = scmp.ne.s32.totalorder %s263, %s277
      %p279 = scmp.eq.s32.totalorder %s33, 0
      %p280 = por %p278, %p279
      %s282 = sadd.s32 %s281, 1
      %p285 = scmp.eq.s32.totalorder %s27, 1
      %p286 = scmp.ne.s32.totalorder %s281, %s283
      %p287 = scmp.eq.s32.totalorder %s27, 0
      %p288 = por %p286, %p287
      %p289 = scmp.ne.s32.totalorder %s281, %s283
      %p290 = scmp.eq.s32.totalorder %s32, 1
      %p291 = por %p289, %p290
      %p292 = scmp.ne.s32.totalorder %s283, %s284
      %p293 = scmp.eq.s32.totalorder %s32, 0
      %p294 = por %p292, %p293
      %p295 = scmp.ne.s32.totalorder %s283, %s284
      %p296 = scmp.eq.s32.totalorder %s33, 1
      %p297 = por %p295, %p296
      %p299 = scmp.ne.s32.totalorder %s284, %s298
      %p300 = scmp.eq.s32.totalorder %s33, 0
      %p301 = por %p299, %p300
      %s302 = ssub.s32 %s27, %s34
      %p303 = scmp.eq.s32.totalorder %s302, 0
      %s305 = sadd.s32 %s304, 1
      %s306 = scalar_select %p303, %s304, %s305
      %p309 = pneg %p303
      %p310 = scmp.eq.s32.totalorder %s27, 1
      %p311 = por %p309, %p310
      %p312 = scmp.ne.s32.totalorder %s304, %s307
      %p313 = scmp.eq.s32.totalorder %s27, 0
      %p314 = por %p312, %p313
      %p315 = scmp.ne.s32.totalorder %s304, %s307
      %p316 = scmp.eq.s32.totalorder %s32, 1
      %p317 = por %p315, %p316
      %p318 = scmp.ne.s32.totalorder %s307, %s308
      %p319 = scmp.eq.s32.totalorder %s32, 0
      %p320 = por %p318, %p319
      %p321 = scmp.ne.s32.totalorder %s307, %s308
      %p322 = scmp.eq.s32.totalorder %s33, 1
      %p323 = por %p321, %p322
      %p325 = scmp.ne.s32.totalorder %s308, %s324
      %p326 = scmp.eq.s32.totalorder %s33, 0
      %p327 = por %p325, %p326
      %s328 = ssub.s32 %s27, %s34
      %p329 = scmp.eq.s32.totalorder %s328, 0
      %s331 = sadd.s32 %s330, 1
      %s332 = scalar_select %p329, %s330, %s331
      %p335 = pneg %p329
      %p336 = scmp.eq.s32.totalorder %s27, 1
      %p337 = por %p335, %p336
      %p338 = scmp.ne.s32.totalorder %s330, %s333
      %p339 = scmp.eq.s32.totalorder %s27, 0
      %p340 = por %p338, %p339
      %p341 = scmp.ne.s32.totalorder %s330, %s333
      %p342 = scmp.eq.s32.totalorder %s32, 1
      %p343 = por %p341, %p342
      %p344 = scmp.ne.s32.totalorder %s333, %s334
      %p345 = scmp.eq.s32.totalorder %s32, 0
      %p346 = por %p344, %p345
      %p347 = scmp.ne.s32.totalorder %s333, %s334
      %p348 = scmp.eq.s32.totalorder %s33, 1
      %p349 = por %p347, %p348
      %p351 = scmp.ne.s32.totalorder %s334, %s350
      %p352 = scmp.eq.s32.totalorder %s33, 0
      %p353 = por %p351, %p352
      %p354 = scmp.le.s32.totalorder 1, %s27
      %p355 = scmp.lt.s32.totalorder %s27, 3
      %p356 = pnand %p354, %p355
      %p357 = pneg %p356
      // Predicated region
      $region9: #{node_encoder_forward.1} parent=5 // pred_check
        _
      $region10: #{node_encoder_forward.1} parent=5 // pred_check_branch
        %359 = sbr.rel (%p356) target = $region12
      $region11: #{node_encoder_forward.1} parent=5 // pred_region
        %s360 = ssub.s32 %s27, 1
        // Predicated region
        $region13: #{node_encoder_forward.1} parent=11 // pred_check
          %p361 = pneg %p126
        $region14: #{node_encoder_forward.1} parent=11 // pred_check_branch
          %363 = sbr.rel (%p361) target = $region16
        $region15: #{node_encoder_forward.1} parent=11 // pred_region
          %s365 = ssub.s32 8192, 8192
          %366 = vsyncadd [#allocation5], %s365
          %s367 = sshll.u32 [#allocation6], 4
          %s368 = int_to_ptr.vmem [resolvable:$true] %s367
          %373 = dma.hbm_to_vmem [thread:$0]  %s3, 8192, %s368, [#allocation5], 128, 128, 8
        $region16: #{node_encoder_forward.1} parent=11 // pred_fallthru
          _
        // Predicated region
        $region17: #{node_encoder_forward.1} parent=11 // pred_check
          %p374 = pneg %p147
        $region18: #{node_encoder_forward.1} parent=11 // pred_check_branch
          %376 = sbr.rel (%p374) target = $region20
        $region19: #{node_encoder_forward.1} parent=11 // pred_region
          _
        $region20: #{node_encoder_forward.1} parent=11 // pred_fallthru
          _
        // Predicated region
        $region21: #{node_encoder_forward.1} parent=11 // pred_check
          %p377 = pneg %p168
        $region22: #{node_encoder_forward.1} parent=11 // pred_check_branch
          %379 = sbr.rel (%p377) target = $region24
        $region23: #{node_encoder_forward.1} parent=11 // pred_region
          %s381 = ssub.s32 8192, 8192
          %382 = vsyncadd [#allocation8], %s381
          %s383 = sshll.u32 [#allocation7], 4
          %s384 = int_to_ptr.vmem [resolvable:$true] %s383
          %389 = dma.hbm_to_vmem [thread:$0]  %s5, 8192, %s384, [#allocation8], 128, 128, 8
        $region24: #{node_encoder_forward.1} parent=11 // pred_fallthru
          _
        // Predicated region
        $region25: #{node_encoder_forward.1} parent=11 // pred_check
          %p390 = pneg %p189
        $region26: #{node_encoder_forward.1} parent=11 // pred_check_branch
          %392 = sbr.rel (%p390) target = $region28
        $region27: #{node_encoder_forward.1} parent=11 // pred_region
          _
        $region28: #{node_encoder_forward.1} parent=11 // pred_fallthru
          _
        // Predicated region
        $region29: #{node_encoder_forward.1} parent=11 // pred_check
          %p393 = pneg %p210
        $region30: #{node_encoder_forward.1} parent=11 // pred_check_branch
          %395 = sbr.rel (%p393) target = $region32
        $region31: #{node_encoder_forward.1} parent=11 // pred_region
          _
        $region32: #{node_encoder_forward.1} parent=11 // pred_fallthru
          _
        // Predicated region
        $region33: #{node_encoder_forward.1} parent=11 // pred_check
          %p396 = pneg %p231
        $region34: #{node_encoder_forward.1} parent=11 // pred_check_branch
          %398 = sbr.rel (%p396) target = $region36
        $region35: #{node_encoder_forward.1} parent=11 // pred_region
          _
        $region36: #{node_encoder_forward.1} parent=11 // pred_fallthru
          _
        // Predicated region
        $region37: #{node_encoder_forward.1} parent=11 // pred_check
          %p399 = pneg %p252
        $region38: #{node_encoder_forward.1} parent=11 // pred_check_branch
          %401 = sbr.rel (%p399) target = $region40
        $region39: #{node_encoder_forward.1} parent=11 // pred_region
          _
        $region40: #{node_encoder_forward.1} parent=11 // pred_fallthru
          _
        // Predicated region
        $region41: #{node_encoder_forward.1} parent=11 // pred_check
          %p402 = pneg %p273
        $region42: #{node_encoder_forward.1} parent=11 // pred_check_branch
          %404 = sbr.rel (%p402) target = $region44
        $region43: #{node_encoder_forward.1} parent=11 // pred_region
          _
        $region44: #{node_encoder_forward.1} parent=11 // pred_fallthru
          _
        // Predicated region
        $region45: #{node_encoder_forward.1} parent=11 // pred_check
          %p405 = pneg %p294
        $region46: #{node_encoder_forward.1} parent=11 // pred_check_branch
          %407 = sbr.rel (%p405) target = $region48
        $region47: #{node_encoder_forward.1} parent=11 // pred_region
          _
        $region48: #{node_encoder_forward.1} parent=11 // pred_fallthru
          _
      $region12: #{node_encoder_forward.1} parent=5 // pred_fallthru
        _
      %p408 = scmp.lt.s32.totalorder %s27, 2
      // Predicated region
      $region49: #{node_encoder_forward.1} parent=5 // pred_check
        %p409 = pneg %p408
      $region50: #{node_encoder_forward.1} parent=5 // pred_check_branch
        %411 = sbr.rel (%p409) target = $region52
      $region51: #{node_encoder_forward.1} parent=5 // pred_region
        // Predicated region
        $region53: #{node_encoder_forward.1} parent=51 // pred_check
          %p412 = pneg %p47
        $region54: #{node_encoder_forward.1} parent=51 // pred_check_branch
          %414 = sbr.rel (%p412) target = $region56
        $region55: #{node_encoder_forward.1} parent=51 // pred_region
          %s415 = sand.u32 %s37, 1
          %s416 = scalar_lea.sflag [#allocation3], %s415
          %s417 = sand.u32 %s37, 1
          %s418 = smul.addr %s417, 512
          %s419 = scalar_lea.vmem [#allocation2], %s418
          %s420 = smul.u32 16, %s27
          %s422 = ssub.s32 8192, 8192
          %423 = vsyncadd %s416, %s422
          %s424 = smul.addr %s420, 4
          %s425 = smul.addr %s424, 128
          %s426 = scalar_lea.hbm %s0, %s425
          %s427 = sshll.u32 %s419, 4
          %s428 = int_to_ptr.vmem [resolvable:$true] %s427
          %433 = dma.hbm_to_vmem [thread:$0]  %s426, 8192, %s428, %s416, 512, 512, 32
        $region56: #{node_encoder_forward.1} parent=51 // pred_fallthru
          _
        // Predicated region
        $region57: #{node_encoder_forward.1} parent=51 // pred_check
          %p434 = pneg %p73
        $region58: #{node_encoder_forward.1} parent=51 // pred_check_branch
          %436 = sbr.rel (%p434) target = $region60
        $region59: #{node_encoder_forward.1} parent=51 // pred_region
          %s437 = sand.u32 %s27, 1
          %s438 = scalar_lea.sflag [#allocation5], %s437
          %s439 = sand.u32 %s63, 1
          %s440 = smul.addr %s439, 512
          %s441 = scalar_lea.vmem [#allocation4], %s440
          %s442 = smul.u32 16, %s27
          %s444 = ssub.s32 8192, 8192
          %445 = vsyncadd %s438, %s444
          %s446 = smul.addr %s442, 4
          %s447 = smul.addr %s446, 128
          %s448 = scalar_lea.hbm %s1, %s447
          %s449 = sshll.u32 %s441, 4
          %s450 = int_to_ptr.vmem [resolvable:$true] %s449
          %455 = dma.hbm_to_vmem [thread:$0]  %s448, 8192, %s450, %s438, 512, 512, 32
        $region60: #{node_encoder_forward.1} parent=51 // pred_fallthru
          _
        // Predicated region
        $region61: #{node_encoder_forward.1} parent=51 // pred_check
          %p456 = pneg %p99
        $region62: #{node_encoder_forward.1} parent=51 // pred_check_branch
          %458 = sbr.rel (%p456) target = $region64
        $region63: #{node_encoder_forward.1} parent=51 // pred_region
          %s459 = smul.u32 16, %s27
          %p460 = scmp.lt.s32.totalorder %s459, 31
          %s461 = scalar_select %p460, %s459, 31
          %s462 = smul.addr %s461, 8
          %s463 = scalar_lea.vmem %s2, %s462
          %s464 = smul.u32 16, %s27
        $region64: #{node_encoder_forward.1} parent=51 // pred_fallthru
          _
      $region52: #{node_encoder_forward.1} parent=5 // pred_fallthru
        _
      %p465 = scmp.le.s32.totalorder 1, %s27
      %p466 = scmp.lt.s32.totalorder %s27, 3
      %p467 = pnand %p465, %p466
      %p468 = pneg %p467
      // Predicated region
      $region65: #{node_encoder_forward.1} parent=5 // pred_check
        _
      $region66: #{node_encoder_forward.1} parent=5 // pred_check_branch
        %470 = sbr.rel (%p467) target = $region68
      $region67: #{node_encoder_forward.1} parent=5 // pred_region
        %s471 = ssub.s32 %s27, 1
        %s472 = sand.u32 %s40, 1
        %s473 = scalar_lea.sflag [#allocation3], %s472
        %s474 = sand.u32 %s40, 1
        %s475 = smul.addr %s474, 512
        %s476 = scalar_lea.vmem [#allocation2], %s475
        // Predicated region
        $region69: #{node_encoder_forward.1} parent=67 // pred_check
          %p477 = pneg %p53
        $region70: #{node_encoder_forward.1} parent=67 // pred_check_branch
          %479 = sbr.rel (%p477) target = $region72
        $region71: #{node_encoder_forward.1} parent=67 // pred_region
          %480 = dma.done %s473, 8192
        $region72: #{node_encoder_forward.1} parent=67 // pred_fallthru
          _
        %s481 = sand.u32 %s32, 1
        %s482 = scalar_lea.sflag [#allocation5], %s481
        %s483 = sand.u32 %s66, 1
        %s484 = smul.addr %s483, 512
        %s485 = scalar_lea.vmem [#allocation4], %s484
        // Predicated region
        $region73: #{node_encoder_forward.1} parent=67 // pred_check
          %p486 = pneg %p79
        $region74: #{node_encoder_forward.1} parent=67 // pred_check_branch
          %488 = sbr.rel (%p486) target = $region76
        $region75: #{node_encoder_forward.1} parent=67 // pred_region
          %489 = dma.done %s482, 8192
        $region76: #{node_encoder_forward.1} parent=67 // pred_fallthru
          _
        // Predicated region
        $region77: #{node_encoder_forward.1} parent=67 // pred_check
          %p490 = pneg %p126
        $region78: #{node_encoder_forward.1} parent=67 // pred_check_branch
          %492 = sbr.rel (%p490) target = $region80
        $region79: #{node_encoder_forward.1} parent=67 // pred_region
          %493 = dma.done [#allocation5], 8192
        $region80: #{node_encoder_forward.1} parent=67 // pred_fallthru
          _
        // Predicated region
        $region81: #{node_encoder_forward.1} parent=67 // pred_check
          %p494 = pneg %p168
        $region82: #{node_encoder_forward.1} parent=67 // pred_check_branch
          %496 = sbr.rel (%p494) target = $region84
        $region83: #{node_encoder_forward.1} parent=67 // pred_region
          %497 = dma.done [#allocation8], 8192
        $region84: #{node_encoder_forward.1} parent=67 // pred_fallthru
          _
        %s498 = sand.u32 %s40, 1
        %s499 = scalar_lea.sflag [#allocation3], %s498
        %s500 = sand.u32 %s40, 1
        %s501 = smul.addr %s500, 512
        %s502 = scalar_lea.vmem [#allocation2], %s501
        %p503 = pneg %p53
        %p504 = pneg %p50
        %s505 = sand.u32 %s32, 1
        %s506 = scalar_lea.sflag [#allocation5], %s505
        %s507 = sand.u32 %s66, 1
        %s508 = smul.addr %s507, 512
        %s509 = scalar_lea.vmem [#allocation4], %s508
        %p510 = pneg %p79
        %p511 = pneg %p76
        %s512 = smul.u32 16, %s32
        %p513 = scmp.lt.s32.totalorder %s512, 31
        %s514 = scalar_select %p513, %s512, 31
        %s515 = smul.addr %s514, 8
        %s516 = scalar_lea.vmem %s2, %s515
        %p517 = pneg %p105
        %p518 = pneg %p102
        %p519 = pneg %p126
        %p520 = pneg %p123
        %p521 = pneg %p147
        %p522 = pneg %p144
        %p523 = pneg %p168
        %p524 = pneg %p165
        %p525 = pneg %p189
        %p526 = pneg %p186
        %p527 = pneg %p210
        %p528 = pneg %p207
        %p529 = pneg %p231
        %p530 = pneg %p228
        %p531 = pneg %p252
        %p532 = pneg %p249
        %p533 = pneg %p273
        %p534 = pneg %p270
        %p535 = pneg %p294
        %p536 = pneg %p291
        %p537 = pneg %p320
        %p538 = pneg %p317
        %s539 = smul.u32 16, %s32
        %p540 = scmp.lt.s32.totalorder %s539, 31
        %s541 = scalar_select %p540, %s539, 31
        %s542 = smul.addr %s541, 8
        %s543 = scalar_lea.vmem %s12, %s542
        %p544 = pneg %p346
        %p545 = pneg %p343
        %s546 = smul.u32 16, %s32
        %p547 = scmp.lt.s32.totalorder %s546, 31
        %s548 = scalar_select %p547, %s546, 31
        %s549 = smul.addr %s548, 8
        %s550 = scalar_lea.vmem %s13, %s549
        %s551 = smul.u32 16, %s32
        %s552 = smul.u32 16, %s32
        %s553 = smul.u32 16, %s32
        %p554 = scmp.lt.s32.totalorder %s553, 31
        %s555 = scalar_select %p554, %s553, 31
        %s556 = smul.addr %s555, 8
        %s557 = scalar_lea.vmem %s2, %s556
        %s558 = smul.u32 16, %s32
        %s559 = smul.u32 16, %s32
        %p560 = scmp.lt.s32.totalorder %s559, 31
        %s561 = scalar_select %p560, %s559, 31
        %s562 = smul.addr %s561, 8
        %s563 = scalar_lea.vmem %s12, %s562
        %s564 = smul.u32 16, %s32
        %s565 = smul.u32 16, %s32
        %p566 = scmp.lt.s32.totalorder %s565, 31
        %s567 = scalar_select %p566, %s565, 31
        %s568 = smul.addr %s567, 8
        %s569 = scalar_lea.vmem %s13, %s568
        %s570 = smul.u32 16, %s32
        %v572 = vld [vmem:[%s476] sm:$0xff]
        %v573 = vld [vmem:[%s476 + $0x8] sm:$0xff]
        %v574 = vld [vmem:[%s476 + $0x10] sm:$0xff]
        %v575 = vld [vmem:[%s476 + $0x18] sm:$0xff]
        %v576 = vld [vmem:[%s476 + $0x20] sm:$0xff]
        %v577 = vld [vmem:[%s476 + $0x28] sm:$0xff]
        %v578 = vld [vmem:[%s476 + $0x30] sm:$0xff]
        %v579 = vld [vmem:[%s476 + $0x38] sm:$0xff]
        %v580 = vld [vmem:[%s476 + $0x40] sm:$0xff]
        %v581 = vld [vmem:[%s476 + $0x48] sm:$0xff]
        %v582 = vld [vmem:[%s476 + $0x50] sm:$0xff]
        %v583 = vld [vmem:[%s476 + $0x58] sm:$0xff]
        %v584 = vld [vmem:[%s476 + $0x60] sm:$0xff]
        %v585 = vld [vmem:[%s476 + $0x68] sm:$0xff]
        %v586 = vld [vmem:[%s476 + $0x70] sm:$0xff]
        %v587 = vld [vmem:[%s476 + $0x78] sm:$0xff]
        %v588 = vld [vmem:[%s476 + $0x80] sm:$0xff]
        %v589 = vld [vmem:[%s476 + $0x88] sm:$0xff]
        %v590 = vld [vmem:[%s476 + $0x90] sm:$0xff]
        %v591 = vld [vmem:[%s476 + $0x98] sm:$0xff]
        %v592 = vld [vmem:[%s476 + $0xa0] sm:$0xff]
        %v593 = vld [vmem:[%s476 + $0xa8] sm:$0xff]
        %v594 = vld [vmem:[%s476 + $0xb0] sm:$0xff]
        %v595 = vld [vmem:[%s476 + $0xb8] sm:$0xff]
        %v596 = vld [vmem:[%s476 + $0xc0] sm:$0xff]
        %v597 = vld [vmem:[%s476 + $0xc8] sm:$0xff]
        %v598 = vld [vmem:[%s476 + $0xd0] sm:$0xff]
        %v599 = vld [vmem:[%s476 + $0xd8] sm:$0xff]
        %v600 = vld [vmem:[%s476 + $0xe0] sm:$0xff]
        %v601 = vld [vmem:[%s476 + $0xe8] sm:$0xff]
        %v602 = vld [vmem:[%s476 + $0xf0] sm:$0xff]
        %v603 = vld [vmem:[%s476 + $0xf8] sm:$0xff]
        %v604 = vld [vmem:[%s476 + $0x100] sm:$0xff]
        %v605 = vld [vmem:[%s476 + $0x108] sm:$0xff]
        %v606 = vld [vmem:[%s476 + $0x110] sm:$0xff]
        %v607 = vld [vmem:[%s476 + $0x118] sm:$0xff]
        %v608 = vld [vmem:[%s476 + $0x120] sm:$0xff]
        %v609 = vld [vmem:[%s476 + $0x128] sm:$0xff]
        %v610 = vld [vmem:[%s476 + $0x130] sm:$0xff]
        %v611 = vld [vmem:[%s476 + $0x138] sm:$0xff]
        %v612 = vld [vmem:[%s476 + $0x140] sm:$0xff]
        %v613 = vld [vmem:[%s476 + $0x148] sm:$0xff]
        %v614 = vld [vmem:[%s476 + $0x150] sm:$0xff]
        %v615 = vld [vmem:[%s476 + $0x158] sm:$0xff]
        %v616 = vld [vmem:[%s476 + $0x160] sm:$0xff]
        %v617 = vld [vmem:[%s476 + $0x168] sm:$0xff]
        %v618 = vld [vmem:[%s476 + $0x170] sm:$0xff]
        %v619 = vld [vmem:[%s476 + $0x178] sm:$0xff]
        %v620 = vld [vmem:[%s476 + $0x180] sm:$0xff]
        %v621 = vld [vmem:[%s476 + $0x188] sm:$0xff]
        %v622 = vld [vmem:[%s476 + $0x190] sm:$0xff]
        %v623 = vld [vmem:[%s476 + $0x198] sm:$0xff]
        %v624 = vld [vmem:[%s476 + $0x1a0] sm:$0xff]
        %v625 = vld [vmem:[%s476 + $0x1a8] sm:$0xff]
        %v626 = vld [vmem:[%s476 + $0x1b0] sm:$0xff]
        %v627 = vld [vmem:[%s476 + $0x1b8] sm:$0xff]
        %v628 = vld [vmem:[%s476 + $0x1c0] sm:$0xff]
        %v629 = vld [vmem:[%s476 + $0x1c8] sm:$0xff]
        %v630 = vld [vmem:[%s476 + $0x1d0] sm:$0xff]
        %v631 = vld [vmem:[%s476 + $0x1d8] sm:$0xff]
        %v632 = vld [vmem:[%s476 + $0x1e0] sm:$0xff]
        %v633 = vld [vmem:[%s476 + $0x1e8] sm:$0xff]
        %v634 = vld [vmem:[%s476 + $0x1f0] sm:$0xff]
        %v635 = vld [vmem:[%s476 + $0x1f8] sm:$0xff]
        %v636 = vpack.c.bf16 %v576, %v572
        %v637 = vpack.c.bf16 %v577, %v573
        %v638 = vpack.c.bf16 %v578, %v574
        %v639 = vpack.c.bf16 %v579, %v575
        %v640 = vpack.c.bf16 %v584, %v580
        %v641 = vpack.c.bf16 %v585, %v581
        %v642 = vpack.c.bf16 %v586, %v582
        %v643 = vpack.c.bf16 %v587, %v583
        %v644 = vpack.c.bf16 %v592, %v588
        %v645 = vpack.c.bf16 %v593, %v589
        %v646 = vpack.c.bf16 %v594, %v590
        %v647 = vpack.c.bf16 %v595, %v591
        %v648 = vpack.c.bf16 %v600, %v596
        %v649 = vpack.c.bf16 %v601, %v597
        %v650 = vpack.c.bf16 %v602, %v598
        %v651 = vpack.c.bf16 %v603, %v599
        %v652 = vpack.c.bf16 %v608, %v604
        %v653 = vpack.c.bf16 %v609, %v605
        %v654 = vpack.c.bf16 %v610, %v606
        %v655 = vpack.c.bf16 %v611, %v607
        %v656 = vpack.c.bf16 %v616, %v612
        %v657 = vpack.c.bf16 %v617, %v613
        %v658 = vpack.c.bf16 %v618, %v614
        %v659 = vpack.c.bf16 %v619, %v615
        %v660 = vpack.c.bf16 %v624, %v620
        %v661 = vpack.c.bf16 %v625, %v621
        %v662 = vpack.c.bf16 %v626, %v622
        %v663 = vpack.c.bf16 %v627, %v623
        %v664 = vpack.c.bf16 %v632, %v628
        %v665 = vpack.c.bf16 %v633, %v629
        %v666 = vpack.c.bf16 %v634, %v630
        %v667 = vpack.c.bf16 %v635, %v631
        %v668 = vld [vmem:[#allocation6] sm:$0xff]
        %v669 = vld [vmem:[#allocation6 + $0x8] sm:$0xff]
        %v670 = vld [vmem:[#allocation6 + $0x10] sm:$0xff]
        %v671 = vld [vmem:[#allocation6 + $0x18] sm:$0xff]
        %v672 = vld [vmem:[#allocation6 + $0x20] sm:$0xff]
        %v673 = vld [vmem:[#allocation6 + $0x28] sm:$0xff]
        %v674 = vld [vmem:[#allocation6 + $0x30] sm:$0xff]
        %v675 = vld [vmem:[#allocation6 + $0x38] sm:$0xff]
        %v676 = vld [vmem:[#allocation6 + $0x40] sm:$0xff]
        %v677 = vld [vmem:[#allocation6 + $0x48] sm:$0xff]
        %v678 = vld [vmem:[#allocation6 + $0x50] sm:$0xff]
        %v679 = vld [vmem:[#allocation6 + $0x58] sm:$0xff]
        %v680 = vld [vmem:[#allocation6 + $0x60] sm:$0xff]
        %v681 = vld [vmem:[#allocation6 + $0x68] sm:$0xff]
        %v682 = vld [vmem:[#allocation6 + $0x70] sm:$0xff]
        %v683 = vld [vmem:[#allocation6 + $0x78] sm:$0xff]
        %v684 = vld [vmem:[#allocation6 + $0x80] sm:$0xff]
        %v685 = vld [vmem:[#allocation6 + $0x88] sm:$0xff]
        %v686 = vld [vmem:[#allocation6 + $0x90] sm:$0xff]
        %v687 = vld [vmem:[#allocation6 + $0x98] sm:$0xff]
        %v688 = vld [vmem:[#allocation6 + $0xa0] sm:$0xff]
        %v689 = vld [vmem:[#allocation6 + $0xa8] sm:$0xff]
        %v690 = vld [vmem:[#allocation6 + $0xb0] sm:$0xff]
        %v691 = vld [vmem:[#allocation6 + $0xb8] sm:$0xff]
        %v692 = vld [vmem:[#allocation6 + $0xc0] sm:$0xff]
        %v693 = vld [vmem:[#allocation6 + $0xc8] sm:$0xff]
        %v694 = vld [vmem:[#allocation6 + $0xd0] sm:$0xff]
        %v695 = vld [vmem:[#allocation6 + $0xd8] sm:$0xff]
        %v696 = vld [vmem:[#allocation6 + $0xe0] sm:$0xff]
        %v697 = vld [vmem:[#allocation6 + $0xe8] sm:$0xff]
        %v698 = vld [vmem:[#allocation6 + $0xf0] sm:$0xff]
        %v699 = vld [vmem:[#allocation6 + $0xf8] sm:$0xff]
        %v700 = vld [vmem:[#allocation6 + $0x100] sm:$0xff]
        %v701 = vld [vmem:[#allocation6 + $0x108] sm:$0xff]
        %v702 = vld [vmem:[#allocation6 + $0x110] sm:$0xff]
        %v703 = vld [vmem:[#allocation6 + $0x118] sm:$0xff]
        %v704 = vld [vmem:[#allocation6 + $0x120] sm:$0xff]
        %v705 = vld [vmem:[#allocation6 + $0x128] sm:$0xff]
        %v706 = vld [vmem:[#allocation6 + $0x130] sm:$0xff]
        %v707 = vld [vmem:[#allocation6 + $0x138] sm:$0xff]
        %v708 = vld [vmem:[#allocation6 + $0x140] sm:$0xff]
        %v709 = vld [vmem:[#allocation6 + $0x148] sm:$0xff]
        %v710 = vld [vmem:[#allocation6 + $0x150] sm:$0xff]
        %v711 = vld [vmem:[#allocation6 + $0x158] sm:$0xff]
        %v712 = vld [vmem:[#allocation6 + $0x160] sm:$0xff]
        %v713 = vld [vmem:[#allocation6 + $0x168] sm:$0xff]
        %v714 = vld [vmem:[#allocation6 + $0x170] sm:$0xff]
        %v715 = vld [vmem:[#allocation6 + $0x178] sm:$0xff]
        %v716 = vld [vmem:[#allocation6 + $0x180] sm:$0xff]
        %v717 = vld [vmem:[#allocation6 + $0x188] sm:$0xff]
        %v718 = vld [vmem:[#allocation6 + $0x190] sm:$0xff]
        %v719 = vld [vmem:[#allocation6 + $0x198] sm:$0xff]
        %v720 = vld [vmem:[#allocation6 + $0x1a0] sm:$0xff]
        %v721 = vld [vmem:[#allocation6 + $0x1a8] sm:$0xff]
        %v722 = vld [vmem:[#allocation6 + $0x1b0] sm:$0xff]
        %v723 = vld [vmem:[#allocation6 + $0x1b8] sm:$0xff]
        %v724 = vld [vmem:[#allocation6 + $0x1c0] sm:$0xff]
        %v725 = vld [vmem:[#allocation6 + $0x1c8] sm:$0xff]
        %v726 = vld [vmem:[#allocation6 + $0x1d0] sm:$0xff]
        %v727 = vld [vmem:[#allocation6 + $0x1d8] sm:$0xff]
        %v728 = vld [vmem:[#allocation6 + $0x1e0] sm:$0xff]
        %v729 = vld [vmem:[#allocation6 + $0x1e8] sm:$0xff]
        %v730 = vld [vmem:[#allocation6 + $0x1f0] sm:$0xff]
        %v731 = vld [vmem:[#allocation6 + $0x1f8] sm:$0xff]
        %v732 = vld [vmem:[%s4] sm:$0x3]
        %v734 = vlaneseq
        %v735 = vshrl.u32 %v734, 7
        %v736 = vsub.s32 0, %v735
        %v737 = vrot.slane %v732, %v736
        %v738 = vlaneseq
        %v739 = vshrl.u32 %v738, 7
        %v740 = vsub.s32 1, %v739
        %v741 = vrot.slane %v732, %v740
        %v808 = vunpack.c.l.b16 %v668
        %v809 = vunpack.c.h.b16 %v668
        %v810 = vunpack.c.l.b16 %v669
        %v811 = vunpack.c.h.b16 %v669
        %v812 = vunpack.c.l.b16 %v670
        %v813 = vunpack.c.h.b16 %v670
        %v814 = vunpack.c.l.b16 %v671
        %v815 = vunpack.c.h.b16 %v671
        %v816 = vunpack.c.l.b16 %v672
        %v817 = vunpack.c.h.b16 %v672
        %v818 = vunpack.c.l.b16 %v673
        %v819 = vunpack.c.h.b16 %v673
        %v820 = vunpack.c.l.b16 %v674
        %v821 = vunpack.c.h.b16 %v674
        %v822 = vunpack.c.l.b16 %v675
        %v823 = vunpack.c.h.b16 %v675
        %v824 = vunpack.c.l.b16 %v676
        %v825 = vunpack.c.h.b16 %v676
        %v826 = vunpack.c.l.b16 %v677
        %v827 = vunpack.c.h.b16 %v677
        %v828 = vunpack.c.l.b16 %v678
        %v829 = vunpack.c.h.b16 %v678
        %v830 = vunpack.c.l.b16 %v679
        %v831 = vunpack.c.h.b16 %v679
        %v832 = vunpack.c.l.b16 %v680
        %v833 = vunpack.c.h.b16 %v680
        %v834 = vunpack.c.l.b16 %v681
        %v835 = vunpack.c.h.b16 %v681
        %v836 = vunpack.c.l.b16 %v682
        %v837 = vunpack.c.h.b16 %v682
        %v838 = vunpack.c.l.b16 %v683
        %v839 = vunpack.c.h.b16 %v683
        %v840 = vunpack.c.l.b16 %v684
        %v841 = vunpack.c.h.b16 %v684
        %v842 = vunpack.c.l.b16 %v685
        %v843 = vunpack.c.h.b16 %v685
        %v844 = vunpack.c.l.b16 %v686
        %v845 = vunpack.c.h.b16 %v686
        %v846 = vunpack.c.l.b16 %v687
        %v847 = vunpack.c.h.b16 %v687
        %v848 = vunpack.c.l.b16 %v688
        %v849 = vunpack.c.h.b16 %v688
        %v850 = vunpack.c.l.b16 %v689
        %v851 = vunpack.c.h.b16 %v689
        %v852 = vunpack.c.l.b16 %v690
        %v853 = vunpack.c.h.b16 %v690
        %v854 = vunpack.c.l.b16 %v691
        %v855 = vunpack.c.h.b16 %v691
        %v856 = vunpack.c.l.b16 %v692
        %v857 = vunpack.c.h.b16 %v692
        %v858 = vunpack.c.l.b16 %v693
        %v859 = vunpack.c.h.b16 %v693
        %v860 = vunpack.c.l.b16 %v694
        %v861 = vunpack.c.h.b16 %v694
        %v862 = vunpack.c.l.b16 %v695
        %v863 = vunpack.c.h.b16 %v695
        %v864 = vunpack.c.l.b16 %v696
        %v865 = vunpack.c.h.b16 %v696
        %v866 = vunpack.c.l.b16 %v697
        %v867 = vunpack.c.h.b16 %v697
        %v868 = vunpack.c.l.b16 %v698
        %v869 = vunpack.c.h.b16 %v698
        %v870 = vunpack.c.l.b16 %v699
        %v871 = vunpack.c.h.b16 %v699
        %v872 = vunpack.c.l.b16 %v700
        %v873 = vunpack.c.h.b16 %v700
        %v874 = vunpack.c.l.b16 %v701
        %v875 = vunpack.c.h.b16 %v701
        %v876 = vunpack.c.l.b16 %v702
        %v877 = vunpack.c.h.b16 %v702
        %v878 = vunpack.c.l.b16 %v703
        %v879 = vunpack.c.h.b16 %v703
        %v880 = vunpack.c.l.b16 %v704
        %v881 = vunpack.c.h.b16 %v704
        %v882 = vunpack.c.l.b16 %v705
        %v883 = vunpack.c.h.b16 %v705
        %v884 = vunpack.c.l.b16 %v706
        %v885 = vunpack.c.h.b16 %v706
        %v886 = vunpack.c.l.b16 %v707
        %v887 = vunpack.c.h.b16 %v707
        %v888 = vunpack.c.l.b16 %v708
        %v889 = vunpack.c.h.b16 %v708
        %v890 = vunpack.c.l.b16 %v709
        %v891 = vunpack.c.h.b16 %v709
        %v892 = vunpack.c.l.b16 %v710
        %v893 = vunpack.c.h.b16 %v710
        %v894 = vunpack.c.l.b16 %v711
        %v895 = vunpack.c.h.b16 %v711
        %v896 = vunpack.c.l.b16 %v712
        %v897 = vunpack.c.h.b16 %v712
        %v898 = vunpack.c.l.b16 %v713
        %v899 = vunpack.c.h.b16 %v713
        %v900 = vunpack.c.l.b16 %v714
        %v901 = vunpack.c.h.b16 %v714
        %v902 = vunpack.c.l.b16 %v715
        %v903 = vunpack.c.h.b16 %v715
        %v904 = vunpack.c.l.b16 %v716
        %v905 = vunpack.c.h.b16 %v716
        %v906 = vunpack.c.l.b16 %v717
        %v907 = vunpack.c.h.b16 %v717
        %v908 = vunpack.c.l.b16 %v718
        %v909 = vunpack.c.h.b16 %v718
        %v910 = vunpack.c.l.b16 %v719
        %v911 = vunpack.c.h.b16 %v719
        %v912 = vunpack.c.l.b16 %v720
        %v913 = vunpack.c.h.b16 %v720
        %v914 = vunpack.c.l.b16 %v721
        %v915 = vunpack.c.h.b16 %v721
        %v916 = vunpack.c.l.b16 %v722
        %v917 = vunpack.c.h.b16 %v722
        %v918 = vunpack.c.l.b16 %v723
        %v919 = vunpack.c.h.b16 %v723
        %v920 = vunpack.c.l.b16 %v724
        %v921 = vunpack.c.h.b16 %v724
        %v922 = vunpack.c.l.b16 %v725
        %v923 = vunpack.c.h.b16 %v725
        %v924 = vunpack.c.l.b16 %v726
        %v925 = vunpack.c.h.b16 %v726
        %v926 = vunpack.c.l.b16 %v727
        %v927 = vunpack.c.h.b16 %v727
        %v928 = vunpack.c.l.b16 %v728
        %v929 = vunpack.c.h.b16 %v728
        %v930 = vunpack.c.l.b16 %v729
        %v931 = vunpack.c.h.b16 %v729
        %v932 = vunpack.c.l.b16 %v730
        %v933 = vunpack.c.h.b16 %v730
        %v934 = vunpack.c.l.b16 %v731
        %v935 = vunpack.c.h.b16 %v731
        %v936 = vpack.c.b16 %v810, %v808
        %v937 = vpack.c.b16 %v811, %v809
        %v938 = vpack.c.b16 %v814, %v812
        %v939 = vpack.c.b16 %v815, %v813
        %v940 = vpack.c.b16 %v818, %v816
        %v941 = vpack.c.b16 %v819, %v817
        %v942 = vpack.c.b16 %v822, %v820
        %v943 = vpack.c.b16 %v823, %v821
        %v944 = vpack.c.b16 %v826, %v824
        %v945 = vpack.c.b16 %v827, %v825
        %v946 = vpack.c.b16 %v830, %v828
        %v947 = vpack.c.b16 %v831, %v829
        %v948 = vpack.c.b16 %v834, %v832
        %v949 = vpack.c.b16 %v835, %v833
        %v950 = vpack.c.b16 %v838, %v836
        %v951 = vpack.c.b16 %v839, %v837
        %v952 = vpack.c.b16 %v842, %v840
        %v953 = vpack.c.b16 %v843, %v841
        %v954 = vpack.c.b16 %v846, %v844
        %v955 = vpack.c.b16 %v847, %v845
        %v956 = vpack.c.b16 %v850, %v848
        %v957 = vpack.c.b16 %v851, %v849
        %v958 = vpack.c.b16 %v854, %v852
        %v959 = vpack.c.b16 %v855, %v853
        %v960 = vpack.c.b16 %v858, %v856
        %v961 = vpack.c.b16 %v859, %v857
        %v962 = vpack.c.b16 %v862, %v860
        %v963 = vpack.c.b16 %v863, %v861
        %v964 = vpack.c.b16 %v866, %v864
        %v965 = vpack.c.b16 %v867, %v865
        %v966 = vpack.c.b16 %v870, %v868
        %v967 = vpack.c.b16 %v871, %v869
        %v968 = vpack.c.b16 %v874, %v872
        %v969 = vpack.c.b16 %v875, %v873
        %v970 = vpack.c.b16 %v878, %v876
        %v971 = vpack.c.b16 %v879, %v877
        %v972 = vpack.c.b16 %v882, %v880
        %v973 = vpack.c.b16 %v883, %v881
        %v974 = vpack.c.b16 %v886, %v884
        %v975 = vpack.c.b16 %v887, %v885
        %v976 = vpack.c.b16 %v890, %v888
        %v977 = vpack.c.b16 %v891, %v889
        %v978 = vpack.c.b16 %v894, %v892
        %v979 = vpack.c.b16 %v895, %v893
        %v980 = vpack.c.b16 %v898, %v896
        %v981 = vpack.c.b16 %v899, %v897
        %v982 = vpack.c.b16 %v902, %v900
        %v983 = vpack.c.b16 %v903, %v901
        %v984 = vpack.c.b16 %v906, %v904
        %v985 = vpack.c.b16 %v907, %v905
        %v986 = vpack.c.b16 %v910, %v908
        %v987 = vpack.c.b16 %v911, %v909
        %v988 = vpack.c.b16 %v914, %v912
        %v989 = vpack.c.b16 %v915, %v913
        %v990 = vpack.c.b16 %v918, %v916
        %v991 = vpack.c.b16 %v919, %v917
        %v992 = vpack.c.b16 %v922, %v920
        %v993 = vpack.c.b16 %v923, %v921
        %v994 = vpack.c.b16 %v926, %v924
        %v995 = vpack.c.b16 %v927, %v925
        %v996 = vpack.c.b16 %v930, %v928
        %v997 = vpack.c.b16 %v931, %v929
        %v998 = vpack.c.b16 %v934, %v932
        %v999 = vpack.c.b16 %v935, %v933
        %1064 = vmatprep.subr.bf16.mxu0 %v937
        %1065 = vmatpush1.bf16.msra.mxu0 %v936
        %1066 = vmatprep.subr.bf16.mxu0 %v939
        %1067 = vmatpush1.bf16.msra.mxu0 %v938
        %1068 = vmatprep.subr.bf16.mxu0 %v941
        %1069 = vmatpush1.bf16.msra.mxu0 %v940
        %1070 = vmatprep.subr.bf16.mxu0 %v943
        %1071 = vmatpush1.bf16.msra.mxu0 %v942
        %1072 = vmatprep.subr.bf16.mxu0 %v945
        %1073 = vmatpush1.bf16.msra.mxu0 %v944
        %1074 = vmatprep.subr.bf16.mxu0 %v947
        %1075 = vmatpush1.bf16.msra.mxu0 %v946
        %1076 = vmatprep.subr.bf16.mxu0 %v949
        %1077 = vmatpush1.bf16.msra.mxu0 %v948
        %1078 = vmatprep.subr.bf16.mxu0 %v951
        %1079 = vmatpush1.bf16.msra.mxu0 %v950
        %1080 = vmatprep.subr.bf16.mxu0 %v953
        %1081 = vmatpush1.bf16.msra.mxu0 %v952
        %1082 = vmatprep.subr.bf16.mxu0 %v955
        %1083 = vmatpush1.bf16.msra.mxu0 %v954
        %1084 = vmatprep.subr.bf16.mxu0 %v957
        %1085 = vmatpush1.bf16.msra.mxu0 %v956
        %1086 = vmatprep.subr.bf16.mxu0 %v959
        %1087 = vmatpush1.bf16.msra.mxu0 %v958
        %1088 = vmatprep.subr.bf16.mxu0 %v961
        %1089 = vmatpush1.bf16.msra.mxu0 %v960
        %1090 = vmatprep.subr.bf16.mxu0 %v963
        %1091 = vmatpush1.bf16.msra.mxu0 %v962
        %1092 = vmatprep.subr.bf16.mxu0 %v965
        %1093 = vmatpush1.bf16.msra.mxu0 %v964
        %1094 = vmatprep.subr.bf16.mxu0 %v967
        %1095 = vmatpush1.bf16.msra.mxu0 %v966
        %1096 = vmatprep.mubr.bf16.mxu0 %v637
        %1097 = vmatmul.mubr.bf16.gmra.mrb[0].mxu0 %v636
        %v1098 = vpop.f32.mrb[0].mxu0
        %v1099 = vadd.f32 %v737, %v1098
        %v1100 = vpop.f32.mrb[0].mxu0
        %v1101 = vadd.f32 %v741, %v1100
        %v1102 = vpop.f32.mrb[0].mxu0
        %v1103 = vadd.f32 %v737, %v1102
        %v1104 = vpop.f32.mrb[0].mxu0
        %v1105 = vadd.f32 %v741, %v1104
        %1106 = vmatprep.mubr.bf16.mxu0 %v641
        %1107 = vmatmul.mubr.bf16.gmra.mrb[0].mxu0 %v640
        %v1108 = vpop.f32.mrb[0].mxu0
        %v1109 = vadd.f32 %v737, %v1108
        %v1110 = vpop.f32.mrb[0].mxu0
        %v1111 = vadd.f32 %v741, %v1110
        %v1112 = vpop.f32.mrb[0].mxu0
        %v1113 = vadd.f32 %v737, %v1112
        %v1114 = vpop.f32.mrb[0].mxu0
        %v1115 = vadd.f32 %v741, %v1114
        %1116 = vmatprep.mubr.bf16.mxu0 %v645
        %1117 = vmatmul.mubr.bf16.gmra.mrb[0].mxu0 %v644
        %v1118 = vpop.f32.mrb[0].mxu0
        %v1119 = vadd.f32 %v737, %v1118
        %v1120 = vpop.f32.mrb[0].mxu0
        %v1121 = vadd.f32 %v741, %v1120
        %v1122 = vpop.f32.mrb[0].mxu0
        %v1123 = vadd.f32 %v737, %v1122
        %v1124 = vpop.f32.mrb[0].mxu0
        %v1125 = vadd.f32 %v741, %v1124
        %1126 = vmatprep.mubr.bf16.mxu0 %v649
        %1127 = vmatmul.mubr.bf16.gmra.mrb[0].mxu0 %v648
        %v1128 = vpop.f32.mrb[0].mxu0
        %v1129 = vadd.f32 %v737, %v1128
        %v1130 = vpop.f32.mrb[0].mxu0
        %v1131 = vadd.f32 %v741, %v1130
        %v1132 = vpop.f32.mrb[0].mxu0
        %v1133 = vadd.f32 %v737, %v1132
        %v1134 = vpop.f32.mrb[0].mxu0
        %v1135 = vadd.f32 %v741, %v1134
        %1136 = vmatprep.mubr.bf16.mxu0 %v653
        %1137 = vmatmul.mubr.bf16.gmra.mrb[0].mxu0 %v652
        %v1138 = vpop.f32.mrb[0].mxu0
        %v1139 = vadd.f32 %v737, %v1138
        %v1140 = vpop.f32.mrb[0].mxu0
        %v1141 = vadd.f32 %v741, %v1140
        %v1142 = vpop.f32.mrb[0].mxu0
        %v1143 = vadd.f32 %v737, %v1142
        %v1144 = vpop.f32.mrb[0].mxu0
        %v1145 = vadd.f32 %v741, %v1144
        %1146 = vmatprep.mubr.bf16.mxu0 %v657
        %1147 = vmatmul.mubr.bf16.gmra.mrb[0].mxu0 %v656
        %v1148 = vpop.f32.mrb[0].mxu0
        %v1149 = vadd.f32 %v737, %v1148
        %v1150 = vpop.f32.mrb[0].mxu0
        %v1151 = vadd.f32 %v741, %v1150
        %v1152 = vpop.f32.mrb[0].mxu0
        %v1153 = vadd.f32 %v737, %v1152
        %v1154 = vpop.f32.mrb[0].mxu0
        %v1155 = vadd.f32 %v741, %v1154
        %1156 = vmatprep.mubr.bf16.mxu0 %v661
        %1157 = vmatmul.mubr.bf16.gmra.mrb[0].mxu0 %v660
        %v1158 = vpop.f32.mrb[0].mxu0
        %v1159 = vadd.f32 %v737, %v1158
        %v1160 = vpop.f32.mrb[0].mxu0
        %v1161 = vadd.f32 %v741, %v1160
        %v1162 = vpop.f32.mrb[0].mxu0
        %v1163 = vadd.f32 %v737, %v1162
        %v1164 = vpop.f32.mrb[0].mxu0
        %v1165 = vadd.f32 %v741, %v1164
        %1166 = vmatprep.mubr.bf16.mxu0 %v665
        %1167 = vmatmul.mubr.bf16.gmra.mrb[0].mxu0 %v664
        %v1168 = vpop.f32.mrb[0].mxu0
        %v1169 = vadd.f32 %v737, %v1168
        %v1170 = vpop.f32.mrb[0].mxu0
        %v1171 = vadd.f32 %v741, %v1170
        %v1172 = vpop.f32.mrb[0].mxu0
        %v1173 = vadd.f32 %v737, %v1172
        %v1174 = vpop.f32.mrb[0].mxu0
        %v1175 = vadd.f32 %v741, %v1174
        %1176 = vdwg.mxu0
        %1177 = vmatprep.subr.bf16.mxu0 %v969
        %1178 = vmatpush1.bf16.msra.mxu0 %v968
        %1179 = vmatprep.subr.bf16.mxu0 %v971
        %1180 = vmatpush1.bf16.msra.mxu0 %v970
        %1181 = vmatprep.subr.bf16.mxu0 %v973
        %1182 = vmatpush1.bf16.msra.mxu0 %v972
        %1183 = vmatprep.subr.bf16.mxu0 %v975
        %1184 = vmatpush1.bf16.msra.mxu0 %v974
        %1185 = vmatprep.subr.bf16.mxu0 %v977
        %1186 = vmatpush1.bf16.msra.mxu0 %v976
        %1187 = vmatprep.subr.bf16.mxu0 %v979
        %1188 = vmatpush1.bf16.msra.mxu0 %v978
        %1189 = vmatprep.subr.bf16.mxu0 %v981
        %1190 = vmatpush1.bf16.msra.mxu0 %v980
        %1191 = vmatprep.subr.bf16.mxu0 %v983
        %1192 = vmatpush1.bf16.msra.mxu0 %v982
        %1193 = vmatprep.subr.bf16.mxu0 %v985
        %1194 = vmatpush1.bf16.msra.mxu0 %v984
        %1195 = vmatprep.subr.bf16.mxu0 %v987
        %1196 = vmatpush1.bf16.msra.mxu0 %v986
        %1197 = vmatprep.subr.bf16.mxu0 %v989
        %1198 = vmatpush1.bf16.msra.mxu0 %v988
        %1199 = vmatprep.subr.bf16.mxu0 %v991
        %1200 = vmatpush1.bf16.msra.mxu0 %v990
        %1201 = vmatprep.subr.bf16.mxu0 %v993
        %1202 = vmatpush1.bf16.msra.mxu0 %v992
        %1203 = vmatprep.subr.bf16.mxu0 %v995
        %1204 = vmatpush1.bf16.msra.mxu0 %v994
        %1205 = vmatprep.subr.bf16.mxu0 %v997
        %1206 = vmatpush1.bf16.msra.mxu0 %v996
        %1207 = vmatprep.subr.bf16.mxu0 %v999
        %1208 = vmatpush1.bf16.msra.mxu0 %v998
        %1209 = vmatprep.mubr.bf16.mxu0 %v639
        %1210 = vmatmul.mubr.bf16.gmra.mrb[0].mxu0 %v638
        %v1211 = vpop.f32.mrb[0].mxu0
        %v1212 = vadd.f32 %v1099, %v1211
        %v1213 = vpop.f32.mrb[0].mxu0
        %v1214 = vadd.f32 %v1101, %v1213
        %v1215 = vpop.f32.mrb[0].mxu0
        %v1216 = vadd.f32 %v1103, %v1215
        %v1217 = vpop.f32.mrb[0].mxu0
        %v1218 = vadd.f32 %v1105, %v1217
        %1219 = vmatprep.mubr.bf16.mxu0 %v643
        %1220 = vmatmul.mubr.bf16.gmra.mrb[0].mxu0 %v642
        %v1221 = vpop.f32.mrb[0].mxu0
        %v1222 = vadd.f32 %v1109, %v1221
        %v1223 = vpop.f32.mrb[0].mxu0
        %v1224 = vadd.f32 %v1111, %v1223
        %v1225 = vpop.f32.mrb[0].mxu0
        %v1226 = vadd.f32 %v1113, %v1225
        %v1227 = vpop.f32.mrb[0].mxu0
        %v1228 = vadd.f32 %v1115, %v1227
        %1229 = vmatprep.mubr.bf16.mxu0 %v647
        %1230 = vmatmul.mubr.bf16.gmra.mrb[0].mxu0 %v646
        %v1231 = vpop.f32.mrb[0].mxu0
        %v1232 = vadd.f32 %v1119, %v1231
        %v1233 = vpop.f32.mrb[0].mxu0
        %v1234 = vadd.f32 %v1121, %v1233
        %v1235 = vpop.f32.mrb[0].mxu0
        %v1236 = vadd.f32 %v1123, %v1235
        %v1237 = vpop.f32.mrb[0].mxu0
        %v1238 = vadd.f32 %v1125, %v1237
        %1239 = vmatprep.mubr.bf16.mxu0 %v651
        %1240 = vmatmul.mubr.bf16.gmra.mrb[0].mxu0 %v650
        %v1241 = vpop.f32.mrb[0].mxu0
        %v1242 = vadd.f32 %v1129, %v1241
        %v1243 = vpop.f32.mrb[0].mxu0
        %v1244 = vadd.f32 %v1131, %v1243
        %v1245 = vpop.f32.mrb[0].mxu0
        %v1246 = vadd.f32 %v1133, %v1245
        %v1247 = vpop.f32.mrb[0].mxu0
        %v1248 = vadd.f32 %v1135, %v1247
        %1249 = vmatprep.mubr.bf16.mxu0 %v655
        %1250 = vmatmul.mubr.bf16.gmra.mrb[0].mxu0 %v654
        %v1251 = vpop.f32.mrb[0].mxu0
        %v1252 = vadd.f32 %v1139, %v1251
        %v1253 = vpop.f32.mrb[0].mxu0
        %v1254 = vadd.f32 %v1141, %v1253
        %v1255 = vpop.f32.mrb[0].mxu0
        %v1256 = vadd.f32 %v1143, %v1255
        %v1257 = vpop.f32.mrb[0].mxu0
        %v1258 = vadd.f32 %v1145, %v1257
        %1259 = vmatprep.mubr.bf16.mxu0 %v659
        %1260 = vmatmul.mubr.bf16.gmra.mrb[0].mxu0 %v658
        %v1261 = vpop.f32.mrb[0].mxu0
        %v1262 = vadd.f32 %v1149, %v1261
        %v1263 = vpop.f32.mrb[0].mxu0
        %v1264 = vadd.f32 %v1151, %v1263
        %v1265 = vpop.f32.mrb[0].mxu0
        %v1266 = vadd.f32 %v1153, %v1265
        %v1267 = vpop.f32.mrb[0].mxu0
        %v1268 = vadd.f32 %v1155, %v1267
        %1269 = vmatprep.mubr.bf16.mxu0 %v663
        %1270 = vmatmul.mubr.bf16.gmra.mrb[0].mxu0 %v662
        %v1271 = vpop.f32.mrb[0].mxu0
        %v1272 = vadd.f32 %v1159, %v1271
        %v1273 = vpop.f32.mrb[0].mxu0
        %v1274 = vadd.f32 %v1161, %v1273
        %v1275 = vpop.f32.mrb[0].mxu0
        %v1276 = vadd.f32 %v1163, %v1275
        %v1277 = vpop.f32.mrb[0].mxu0
        %v1278 = vadd.f32 %v1165, %v1277
        %1279 = vmatprep.mubr.bf16.mxu0 %v667
        %1280 = vmatmul.mubr.bf16.gmra.mrb[0].mxu0 %v666
        %v1281 = vpop.f32.mrb[0].mxu0
        %v1282 = vadd.f32 %v1169, %v1281
        %v1283 = vpop.f32.mrb[0].mxu0
        %v1284 = vadd.f32 %v1171, %v1283
        %v1285 = vpop.f32.mrb[0].mxu0
        %v1286 = vadd.f32 %v1173, %v1285
        %v1287 = vpop.f32.mrb[0].mxu0
        %v1288 = vadd.f32 %v1175, %v1287
        %1289 = vdwg.mxu0
        %v1290 = vmax.f32 %v1212, 0.0
        %v1291 = vmax.f32 %v1214, 0.0
        %v1292 = vmax.f32 %v1216, 0.0
        %v1293 = vmax.f32 %v1218, 0.0
        %v1294 = vmax.f32 %v1222, 0.0
        %v1295 = vmax.f32 %v1224, 0.0
        %v1296 = vmax.f32 %v1226, 0.0
        %v1297 = vmax.f32 %v1228, 0.0
        %v1298 = vmax.f32 %v1232, 0.0
        %v1299 = vmax.f32 %v1234, 0.0
        %v1300 = vmax.f32 %v1236, 0.0
        %v1301 = vmax.f32 %v1238, 0.0
        %v1302 = vmax.f32 %v1242, 0.0
        %v1303 = vmax.f32 %v1244, 0.0
        %v1304 = vmax.f32 %v1246, 0.0
        %v1305 = vmax.f32 %v1248, 0.0
        %v1306 = vmax.f32 %v1252, 0.0
        %v1307 = vmax.f32 %v1254, 0.0
        %v1308 = vmax.f32 %v1256, 0.0
        %v1309 = vmax.f32 %v1258, 0.0
        %v1310 = vmax.f32 %v1262, 0.0
        %v1311 = vmax.f32 %v1264, 0.0
        %v1312 = vmax.f32 %v1266, 0.0
        %v1313 = vmax.f32 %v1268, 0.0
        %v1314 = vmax.f32 %v1272, 0.0
        %v1315 = vmax.f32 %v1274, 0.0
        %v1316 = vmax.f32 %v1276, 0.0
        %v1317 = vmax.f32 %v1278, 0.0
        %v1318 = vmax.f32 %v1282, 0.0
        %v1319 = vmax.f32 %v1284, 0.0
        %v1320 = vmax.f32 %v1286, 0.0
        %v1321 = vmax.f32 %v1288, 0.0
        %v1322 = vld [vmem:[%s485] sm:$0xff]
        %v1323 = vld [vmem:[%s485 + $0x8] sm:$0xff]
        %v1324 = vld [vmem:[%s485 + $0x10] sm:$0xff]
        %v1325 = vld [vmem:[%s485 + $0x18] sm:$0xff]
        %v1326 = vld [vmem:[%s485 + $0x20] sm:$0xff]
        %v1327 = vld [vmem:[%s485 + $0x28] sm:$0xff]
        %v1328 = vld [vmem:[%s485 + $0x30] sm:$0xff]
        %v1329 = vld [vmem:[%s485 + $0x38] sm:$0xff]
        %v1330 = vld [vmem:[%s485 + $0x40] sm:$0xff]
        %v1331 = vld [vmem:[%s485 + $0x48] sm:$0xff]
        %v1332 = vld [vmem:[%s485 + $0x50] sm:$0xff]
        %v1333 = vld [vmem:[%s485 + $0x58] sm:$0xff]
        %v1334 = vld [vmem:[%s485 + $0x60] sm:$0xff]
        %v1335 = vld [vmem:[%s485 + $0x68] sm:$0xff]
        %v1336 = vld [vmem:[%s485 + $0x70] sm:$0xff]
        %v1337 = vld [vmem:[%s485 + $0x78] sm:$0xff]
        %v1338 = vld [vmem:[%s485 + $0x80] sm:$0xff]
        %v1339 = vld [vmem:[%s485 + $0x88] sm:$0xff]
        %v1340 = vld [vmem:[%s485 + $0x90] sm:$0xff]
        %v1341 = vld [vmem:[%s485 + $0x98] sm:$0xff]
        %v1342 = vld [vmem:[%s485 + $0xa0] sm:$0xff]
        %v1343 = vld [vmem:[%s485 + $0xa8] sm:$0xff]
        %v1344 = vld [vmem:[%s485 + $0xb0] sm:$0xff]
        %v1345 = vld [vmem:[%s485 + $0xb8] sm:$0xff]
        %v1346 = vld [vmem:[%s485 + $0xc0] sm:$0xff]
        %v1347 = vld [vmem:[%s485 + $0xc8] sm:$0xff]
        %v1348 = vld [vmem:[%s485 + $0xd0] sm:$0xff]
        %v1349 = vld [vmem:[%s485 + $0xd8] sm:$0xff]
        %v1350 = vld [vmem:[%s485 + $0xe0] sm:$0xff]
        %v1351 = vld [vmem:[%s485 + $0xe8] sm:$0xff]
        %v1352 = vld [vmem:[%s485 + $0xf0] sm:$0xff]
        %v1353 = vld [vmem:[%s485 + $0xf8] sm:$0xff]
        %v1354 = vld [vmem:[%s485 + $0x100] sm:$0xff]
        %v1355 = vld [vmem:[%s485 + $0x108] sm:$0xff]
        %v1356 = vld [vmem:[%s485 + $0x110] sm:$0xff]
        %v1357 = vld [vmem:[%s485 + $0x118] sm:$0xff]
        %v1358 = vld [vmem:[%s485 + $0x120] sm:$0xff]
        %v1359 = vld [vmem:[%s485 + $0x128] sm:$0xff]
        %v1360 = vld [vmem:[%s485 + $0x130] sm:$0xff]
        %v1361 = vld [vmem:[%s485 + $0x138] sm:$0xff]
        %v1362 = vld [vmem:[%s485 + $0x140] sm:$0xff]
        %v1363 = vld [vmem:[%s485 + $0x148] sm:$0xff]
        %v1364 = vld [vmem:[%s485 + $0x150] sm:$0xff]
        %v1365 = vld [vmem:[%s485 + $0x158] sm:$0xff]
        %v1366 = vld [vmem:[%s485 + $0x160] sm:$0xff]
        %v1367 = vld [vmem:[%s485 + $0x168] sm:$0xff]
        %v1368 = vld [vmem:[%s485 + $0x170] sm:$0xff]
        %v1369 = vld [vmem:[%s485 + $0x178] sm:$0xff]
        %v1370 = vld [vmem:[%s485 + $0x180] sm:$0xff]
        %v1371 = vld [vmem:[%s485 + $0x188] sm:$0xff]
        %v1372 = vld [vmem:[%s485 + $0x190] sm:$0xff]
        %v1373 = vld [vmem:[%s485 + $0x198] sm:$0xff]
        %v1374 = vld [vmem:[%s485 + $0x1a0] sm:$0xff]
        %v1375 = vld [vmem:[%s485 + $0x1a8] sm:$0xff]
        %v1376 = vld [vmem:[%s485 + $0x1b0] sm:$0xff]
        %v1377 = vld [vmem:[%s485 + $0x1b8] sm:$0xff]
        %v1378 = vld [vmem:[%s485 + $0x1c0] sm:$0xff]
        %v1379 = vld [vmem:[%s485 + $0x1c8] sm:$0xff]
        %v1380 = vld [vmem:[%s485 + $0x1d0] sm:$0xff]
        %v1381 = vld [vmem:[%s485 + $0x1d8] sm:$0xff]
        %v1382 = vld [vmem:[%s485 + $0x1e0] sm:$0xff]
        %v1383 = vld [vmem:[%s485 + $0x1e8] sm:$0xff]
        %v1384 = vld [vmem:[%s485 + $0x1f0] sm:$0xff]
        %v1385 = vld [vmem:[%s485 + $0x1f8] sm:$0xff]
        %v1386 = vpack.c.bf16 %v1326, %v1322
        %v1387 = vpack.c.bf16 %v1327, %v1323
        %v1388 = vpack.c.bf16 %v1328, %v1324
        %v1389 = vpack.c.bf16 %v1329, %v1325
        %v1390 = vpack.c.bf16 %v1334, %v1330
        %v1391 = vpack.c.bf16 %v1335, %v1331
        %v1392 = vpack.c.bf16 %v1336, %v1332
        %v1393 = vpack.c.bf16 %v1337, %v1333
        %v1394 = vpack.c.bf16 %v1342, %v1338
        %v1395 = vpack.c.bf16 %v1343, %v1339
        %v1396 = vpack.c.bf16 %v1344, %v1340
        %v1397 = vpack.c.bf16 %v1345, %v1341
        %v1398 = vpack.c.bf16 %v1350, %v1346
        %v1399 = vpack.c.bf16 %v1351, %v1347
        %v1400 = vpack.c.bf16 %v1352, %v1348
        %v1401 = vpack.c.bf16 %v1353, %v1349
        %v1402 = vpack.c.bf16 %v1358, %v1354
        %v1403 = vpack.c.bf16 %v1359, %v1355
        %v1404 = vpack.c.bf16 %v1360, %v1356
        %v1405 = vpack.c.bf16 %v1361, %v1357
        %v1406 = vpack.c.bf16 %v1366, %v1362
        %v1407 = vpack.c.bf16 %v1367, %v1363
        %v1408 = vpack.c.bf16 %v1368, %v1364
        %v1409 = vpack.c.bf16 %v1369, %v1365
        %v1410 = vpack.c.bf16 %v1374, %v1370
        %v1411 = vpack.c.bf16 %v1375, %v1371
        %v1412 = vpack.c.bf16 %v1376, %v1372
        %v1413 = vpack.c.bf16 %v1377, %v1373
        %v1414 = vpack.c.bf16 %v1382, %v1378
        %v1415 = vpack.c.bf16 %v1383, %v1379
        %v1416 = vpack.c.bf16 %v1384, %v1380
        %v1417 = vpack.c.bf16 %v1385, %v1381
        %v1418 = vld [vmem:[#allocation7] sm:$0xff]
        %v1419 = vld [vmem:[#allocation7 + $0x8] sm:$0xff]
        %v1420 = vld [vmem:[#allocation7 + $0x10] sm:$0xff]
        %v1421 = vld [vmem:[#allocation7 + $0x18] sm:$0xff]
        %v1422 = vld [vmem:[#allocation7 + $0x20] sm:$0xff]
        %v1423 = vld [vmem:[#allocation7 + $0x28] sm:$0xff]
        %v1424 = vld [vmem:[#allocation7 + $0x30] sm:$0xff]
        %v1425 = vld [vmem:[#allocation7 + $0x38] sm:$0xff]
        %v1426 = vld [vmem:[#allocation7 + $0x40] sm:$0xff]
        %v1427 = vld [vmem:[#allocation7 + $0x48] sm:$0xff]
        %v1428 = vld [vmem:[#allocation7 + $0x50] sm:$0xff]
        %v1429 = vld [vmem:[#allocation7 + $0x58] sm:$0xff]
        %v1430 = vld [vmem:[#allocation7 + $0x60] sm:$0xff]
        %v1431 = vld [vmem:[#allocation7 + $0x68] sm:$0xff]
        %v1432 = vld [vmem:[#allocation7 + $0x70] sm:$0xff]
        %v1433 = vld [vmem:[#allocation7 + $0x78] sm:$0xff]
        %v1434 = vld [vmem:[#allocation7 + $0x80] sm:$0xff]
        %v1435 = vld [vmem:[#allocation7 + $0x88] sm:$0xff]
        %v1436 = vld [vmem:[#allocation7 + $0x90] sm:$0xff]
        %v1437 = vld [vmem:[#allocation7 + $0x98] sm:$0xff]
        %v1438 = vld [vmem:[#allocation7 + $0xa0] sm:$0xff]
        %v1439 = vld [vmem:[#allocation7 + $0xa8] sm:$0xff]
        %v1440 = vld [vmem:[#allocation7 + $0xb0] sm:$0xff]
        %v1441 = vld [vmem:[#allocation7 + $0xb8] sm:$0xff]
        %v1442 = vld [vmem:[#allocation7 + $0xc0] sm:$0xff]
        %v1443 = vld [vmem:[#allocation7 + $0xc8] sm:$0xff]
        %v1444 = vld [vmem:[#allocation7 + $0xd0] sm:$0xff]
        %v1445 = vld [vmem:[#allocation7 + $0xd8] sm:$0xff]
        %v1446 = vld [vmem:[#allocation7 + $0xe0] sm:$0xff]
        %v1447 = vld [vmem:[#allocation7 + $0xe8] sm:$0xff]
        %v1448 = vld [vmem:[#allocation7 + $0xf0] sm:$0xff]
        %v1449 = vld [vmem:[#allocation7 + $0xf8] sm:$0xff]
        %v1450 = vld [vmem:[#allocation7 + $0x100] sm:$0xff]
        %v1451 = vld [vmem:[#allocation7 + $0x108] sm:$0xff]
        %v1452 = vld [vmem:[#allocation7 + $0x110] sm:$0xff]
        %v1453 = vld [vmem:[#allocation7 + $0x118] sm:$0xff]
        %v1454 = vld [vmem:[#allocation7 + $0x120] sm:$0xff]
        %v1455 = vld [vmem:[#allocation7 + $0x128] sm:$0xff]
        %v1456 = vld [vmem:[#allocation7 + $0x130] sm:$0xff]
        %v1457 = vld [vmem:[#allocation7 + $0x138] sm:$0xff]
        %v1458 = vld [vmem:[#allocation7 + $0x140] sm:$0xff]
        %v1459 = vld [vmem:[#allocation7 + $0x148] sm:$0xff]
        %v1460 = vld [vmem:[#allocation7 + $0x150] sm:$0xff]
        %v1461 = vld [vmem:[#allocation7 + $0x158] sm:$0xff]
        %v1462 = vld [vmem:[#allocation7 + $0x160] sm:$0xff]
        %v1463 = vld [vmem:[#allocation7 + $0x168] sm:$0xff]
        %v1464 = vld [vmem:[#allocation7 + $0x170] sm:$0xff]
        %v1465 = vld [vmem:[#allocation7 + $0x178] sm:$0xff]
        %v1466 = vld [vmem:[#allocation7 + $0x180] sm:$0xff]
        %v1467 = vld [vmem:[#allocation7 + $0x188] sm:$0xff]
        %v1468 = vld [vmem:[#allocation7 + $0x190] sm:$0xff]
        %v1469 = vld [vmem:[#allocation7 + $0x198] sm:$0xff]
        %v1470 = vld [vmem:[#allocation7 + $0x1a0] sm:$0xff]
        %v1471 = vld [vmem:[#allocation7 + $0x1a8] sm:$0xff]
        %v1472 = vld [vmem:[#allocation7 + $0x1b0] sm:$0xff]
        %v1473 = vld [vmem:[#allocation7 + $0x1b8] sm:$0xff]
        %v1474 = vld [vmem:[#allocation7 + $0x1c0] sm:$0xff]
        %v1475 = vld [vmem:[#allocation7 + $0x1c8] sm:$0xff]
        %v1476 = vld [vmem:[#allocation7 + $0x1d0] sm:$0xff]
        %v1477 = vld [vmem:[#allocation7 + $0x1d8] sm:$0xff]
        %v1478 = vld [vmem:[#allocation7 + $0x1e0] sm:$0xff]
        %v1479 = vld [vmem:[#allocation7 + $0x1e8] sm:$0xff]
        %v1480 = vld [vmem:[#allocation7 + $0x1f0] sm:$0xff]
        %v1481 = vld [vmem:[#allocation7 + $0x1f8] sm:$0xff]
        %v1482 = vld [vmem:[%s6] sm:$0x3]
        %v1484 = vlaneseq
        %v1485 = vshrl.u32 %v1484, 7
        %v1486 = vsub.s32 0, %v1485
        %v1487 = vrot.slane %v1482, %v1486
        %v1488 = vlaneseq
        %v1489 = vshrl.u32 %v1488, 7
        %v1490 = vsub.s32 1, %v1489
        %v1491 = vrot.slane %v1482, %v1490
        %v1558 = vunpack.c.l.b16 %v1418
        %v1559 = vunpack.c.h.b16 %v1418
        %v1560 = vunpack.c.l.b16 %v1419
        %v1561 = vunpack.c.h.b16 %v1419
        %v1562 = vunpack.c.l.b16 %v1420
        %v1563 = vunpack.c.h.b16 %v1420
        %v1564 = vunpack.c.l.b16 %v1421
        %v1565 = vunpack.c.h.b16 %v1421
        %v1566 = vunpack.c.l.b16 %v1422
        %v1567 = vunpack.c.h.b16 %v1422
        %v1568 = vunpack.c.l.b16 %v1423
        %v1569 = vunpack.c.h.b16 %v1423
        %v1570 = vunpack.c.l.b16 %v1424
        %v1571 = vunpack.c.h.b16 %v1424
        %v1572 = vunpack.c.l.b16 %v1425
        %v1573 = vunpack.c.h.b16 %v1425
        %v1574 = vunpack.c.l.b16 %v1426
        %v1575 = vunpack.c.h.b16 %v1426
        %v1576 = vunpack.c.l.b16 %v1427
        %v1577 = vunpack.c.h.b16 %v1427
        %v1578 = vunpack.c.l.b16 %v1428
        %v1579 = vunpack.c.h.b16 %v1428
        %v1580 = vunpack.c.l.b16 %v1429
        %v1581 = vunpack.c.h.b16 %v1429
        %v1582 = vunpack.c.l.b16 %v1430
        %v1583 = vunpack.c.h.b16 %v1430
        %v1584 = vunpack.c.l.b16 %v1431
        %v1585 = vunpack.c.h.b16 %v1431
        %v1586 = vunpack.c.l.b16 %v1432
        %v1587 = vunpack.c.h.b16 %v1432
        %v1588 = vunpack.c.l.b16 %v1433
        %v1589 = vunpack.c.h.b16 %v1433
        %v1590 = vunpack.c.l.b16 %v1434
        %v1591 = vunpack.c.h.b16 %v1434
        %v1592 = vunpack.c.l.b16 %v1435
        %v1593 = vunpack.c.h.b16 %v1435
        %v1594 = vunpack.c.l.b16 %v1436
        %v1595 = vunpack.c.h.b16 %v1436
        %v1596 = vunpack.c.l.b16 %v1437
        %v1597 = vunpack.c.h.b16 %v1437
        %v1598 = vunpack.c.l.b16 %v1438
        %v1599 = vunpack.c.h.b16 %v1438
        %v1600 = vunpack.c.l.b16 %v1439
        %v1601 = vunpack.c.h.b16 %v1439
        %v1602 = vunpack.c.l.b16 %v1440
        %v1603 = vunpack.c.h.b16 %v1440
        %v1604 = vunpack.c.l.b16 %v1441
        %v1605 = vunpack.c.h.b16 %v1441
        %v1606 = vunpack.c.l.b16 %v1442
        %v1607 = vunpack.c.h.b16 %v1442
        %v1608 = vunpack.c.l.b16 %v1443
        %v1609 = vunpack.c.h.b16 %v1443
        %v1610 = vunpack.c.l.b16 %v1444
        %v1611 = vunpack.c.h.b16 %v1444
        %v1612 = vunpack.c.l.b16 %v1445
        %v1613 = vunpack.c.h.b16 %v1445
        %v1614 = vunpack.c.l.b16 %v1446
        %v1615 = vunpack.c.h.b16 %v1446
        %v1616 = vunpack.c.l.b16 %v1447
        %v1617 = vunpack.c.h.b16 %v1447
        %v1618 = vunpack.c.l.b16 %v1448
        %v1619 = vunpack.c.h.b16 %v1448
        %v1620 = vunpack.c.l.b16 %v1449
        %v1621 = vunpack.c.h.b16 %v1449
        %v1622 = vunpack.c.l.b16 %v1450
        %v1623 = vunpack.c.h.b16 %v1450
        %v1624 = vunpack.c.l.b16 %v1451
        %v1625 = vunpack.c.h.b16 %v1451
        %v1626 = vunpack.c.l.b16 %v1452
        %v1627 = vunpack.c.h.b16 %v1452
        %v1628 = vunpack.c.l.b16 %v1453
        %v1629 = vunpack.c.h.b16 %v1453
        %v1630 = vunpack.c.l.b16 %v1454
        %v1631 = vunpack.c.h.b16 %v1454
        %v1632 = vunpack.c.l.b16 %v1455
        %v1633 = vunpack.c.h.b16 %v1455
        %v1634 = vunpack.c.l.b16 %v1456
        %v1635 = vunpack.c.h.b16 %v1456
        %v1636 = vunpack.c.l.b16 %v1457
        %v1637 = vunpack.c.h.b16 %v1457
        %v1638 = vunpack.c.l.b16 %v1458
        %v1639 = vunpack.c.h.b16 %v1458
        %v1640 = vunpack.c.l.b16 %v1459
        %v1641 = vunpack.c.h.b16 %v1459
        %v1642 = vunpack.c.l.b16 %v1460
        %v1643 = vunpack.c.h.b16 %v1460
        %v1644 = vunpack.c.l.b16 %v1461
        %v1645 = vunpack.c.h.b16 %v1461
        %v1646 = vunpack.c.l.b16 %v1462
        %v1647 = vunpack.c.h.b16 %v1462
        %v1648 = vunpack.c.l.b16 %v1463
        %v1649 = vunpack.c.h.b16 %v1463
        %v1650 = vunpack.c.l.b16 %v1464
        %v1651 = vunpack.c.h.b16 %v1464
        %v1652 = vunpack.c.l.b16 %v1465
        %v1653 = vunpack.c.h.b16 %v1465
        %v1654 = vunpack.c.l.b16 %v1466
        %v1655 = vunpack.c.h.b16 %v1466
        %v1656 = vunpack.c.l.b16 %v1467
        %v1657 = vunpack.c.h.b16 %v1467
        %v1658 = vunpack.c.l.b16 %v1468
        %v1659 = vunpack.c.h.b16 %v1468
        %v1660 = vunpack.c.l.b16 %v1469
        %v1661 = vunpack.c.h.b16 %v1469
        %v1662 = vunpack.c.l.b16 %v1470
        %v1663 = vunpack.c.h.b16 %v1470
        %v1664 = vunpack.c.l.b16 %v1471
        %v1665 = vunpack.c.h.b16 %v1471
        %v1666 = vunpack.c.l.b16 %v1472
        %v1667 = vunpack.c.h.b16 %v1472
        %v1668 = vunpack.c.l.b16 %v1473
        %v1669 = vunpack.c.h.b16 %v1473
        %v1670 = vunpack.c.l.b16 %v1474
        %v1671 = vunpack.c.h.b16 %v1474
        %v1672 = vunpack.c.l.b16 %v1475
        %v1673 = vunpack.c.h.b16 %v1475
        %v1674 = vunpack.c.l.b16 %v1476
        %v1675 = vunpack.c.h.b16 %v1476
        %v1676 = vunpack.c.l.b16 %v1477
        %v1677 = vunpack.c.h.b16 %v1477
        %v1678 = vunpack.c.l.b16 %v1478
        %v1679 = vunpack.c.h.b16 %v1478
        %v1680 = vunpack.c.l.b16 %v1479
        %v1681 = vunpack.c.h.b16 %v1479
        %v1682 = vunpack.c.l.b16 %v1480
        %v1683 = vunpack.c.h.b16 %v1480
        %v1684 = vunpack.c.l.b16 %v1481
        %v1685 = vunpack.c.h.b16 %v1481
        %v1686 = vpack.c.b16 %v1560, %v1558
        %v1687 = vpack.c.b16 %v1561, %v1559
        %v1688 = vpack.c.b16 %v1564, %v1562
        %v1689 = vpack.c.b16 %v1565, %v1563
        %v1690 = vpack.c.b16 %v1568, %v1566
        %v1691 = vpack.c.b16 %v1569, %v1567
        %v1692 = vpack.c.b16 %v1572, %v1570
        %v1693 = vpack.c.b16 %v1573, %v1571
        %v1694 = vpack.c.b16 %v1576, %v1574
        %v1695 = vpack.c.b16 %v1577, %v1575
        %v1696 = vpack.c.b16 %v1580, %v1578
        %v1697 = vpack.c.b16 %v1581, %v1579
        %v1698 = vpack.c.b16 %v1584, %v1582
        %v1699 = vpack.c.b16 %v1585, %v1583
        %v1700 = vpack.c.b16 %v1588, %v1586
        %v1701 = vpack.c.b16 %v1589, %v1587
        %v1702 = vpack.c.b16 %v1592, %v1590
        %v1703 = vpack.c.b16 %v1593, %v1591
        %v1704 = vpack.c.b16 %v1596, %v1594
        %v1705 = vpack.c.b16 %v1597, %v1595
        %v1706 = vpack.c.b16 %v1600, %v1598
        %v1707 = vpack.c.b16 %v1601, %v1599
        %v1708 = vpack.c.b16 %v1604, %v1602
        %v1709 = vpack.c.b16 %v1605, %v1603
        %v1710 = vpack.c.b16 %v1608, %v1606
        %v1711 = vpack.c.b16 %v1609, %v1607
        %v1712 = vpack.c.b16 %v1612, %v1610
        %v1713 = vpack.c.b16 %v1613, %v1611
        %v1714 = vpack.c.b16 %v1616, %v1614
        %v1715 = vpack.c.b16 %v1617, %v1615
        %v1716 = vpack.c.b16 %v1620, %v1618
        %v1717 = vpack.c.b16 %v1621, %v1619
        %v1718 = vpack.c.b16 %v1624, %v1622
        %v1719 = vpack.c.b16 %v1625, %v1623
        %v1720 = vpack.c.b16 %v1628, %v1626
        %v1721 = vpack.c.b16 %v1629, %v1627
        %v1722 = vpack.c.b16 %v1632, %v1630
        %v1723 = vpack.c.b16 %v1633, %v1631
        %v1724 = vpack.c.b16 %v1636, %v1634
        %v1725 = vpack.c.b16 %v1637, %v1635
        %v1726 = vpack.c.b16 %v1640, %v1638
        %v1727 = vpack.c.b16 %v1641, %v1639
        %v1728 = vpack.c.b16 %v1644, %v1642
        %v1729 = vpack.c.b16 %v1645, %v1643
        %v1730 = vpack.c.b16 %v1648, %v1646
        %v1731 = vpack.c.b16 %v1649, %v1647
        %v1732 = vpack.c.b16 %v1652, %v1650
        %v1733 = vpack.c.b16 %v1653, %v1651
        %v1734 = vpack.c.b16 %v1656, %v1654
        %v1735 = vpack.c.b16 %v1657, %v1655
        %v1736 = vpack.c.b16 %v1660, %v1658
        %v1737 = vpack.c.b16 %v1661, %v1659
        %v1738 = vpack.c.b16 %v1664, %v1662
        %v1739 = vpack.c.b16 %v1665, %v1663
        %v1740 = vpack.c.b16 %v1668, %v1666
        %v1741 = vpack.c.b16 %v1669, %v1667
        %v1742 = vpack.c.b16 %v1672, %v1670
        %v1743 = vpack.c.b16 %v1673, %v1671
        %v1744 = vpack.c.b16 %v1676, %v1674
        %v1745 = vpack.c.b16 %v1677, %v1675
        %v1746 = vpack.c.b16 %v1680, %v1678
        %v1747 = vpack.c.b16 %v1681, %v1679
        %v1748 = vpack.c.b16 %v1684, %v1682
        %v1749 = vpack.c.b16 %v1685, %v1683
        %1814 = vmatprep.subr.bf16.mxu0 %v1687
        %1815 = vmatpush1.bf16.msra.mxu0 %v1686
        %1816 = vmatprep.subr.bf16.mxu0 %v1689
        %1817 = vmatpush1.bf16.msra.mxu0 %v1688
        %1818 = vmatprep.subr.bf16.mxu0 %v1691
        %1819 = vmatpush1.bf16.msra.mxu0 %v1690
        %1820 = vmatprep.subr.bf16.mxu0 %v1693
        %1821 = vmatpush1.bf16.msra.mxu0 %v1692
        %1822 = vmatprep.subr.bf16.mxu0 %v1695
        %1823 = vmatpush1.bf16.msra.mxu0 %v1694
        %1824 = vmatprep.subr.bf16.mxu0 %v1697
        %1825 = vmatpush1.bf16.msra.mxu0 %v1696
        %1826 = vmatprep.subr.bf16.mxu0 %v1699
        %1827 = vmatpush1.bf16.msra.mxu0 %v1698
        %1828 = vmatprep.subr.bf16.mxu0 %v1701
        %1829 = vmatpush1.bf16.msra.mxu0 %v1700
        %1830 = vmatprep.subr.bf16.mxu0 %v1703
        %1831 = vmatpush1.bf16.msra.mxu0 %v1702
        %1832 = vmatprep.subr.bf16.mxu0 %v1705
        %1833 = vmatpush1.bf16.msra.mxu0 %v1704
        %1834 = vmatprep.subr.bf16.mxu0 %v1707
        %1835 = vmatpush1.bf16.msra.mxu0 %v1706
        %1836 = vmatprep.subr.bf16.mxu0 %v1709
        %1837 = vmatpush1.bf16.msra.mxu0 %v1708
        %1838 = vmatprep.subr.bf16.mxu0 %v1711
        %1839 = vmatpush1.bf16.msra.mxu0 %v1710
        %1840 = vmatprep.subr.bf16.mxu0 %v1713
        %1841 = vmatpush1.bf16.msra.mxu0 %v1712
        %1842 = vmatprep.subr.bf16.mxu0 %v1715
        %1843 = vmatpush1.bf16.msra.mxu0 %v1714
        %1844 = vmatprep.subr.bf16.mxu0 %v1717
        %1845 = vmatpush1.bf16.msra.mxu0 %v1716
        %1846 = vmatprep.mubr.bf16.mxu0 %v1387
        %1847 = vmatmul.mubr.bf16.gmra.mrb[0].mxu0 %v1386
        %v1848 = vpop.f32.mrb[0].mxu0
        %v1849 = vadd.f32 %v1487, %v1848
        %v1850 = vpop.f32.mrb[0].mxu0
        %v1851 = vadd.f32 %v1491, %v1850
        %v1852 = vpop.f32.mrb[0].mxu0
        %v1853 = vadd.f32 %v1487, %v1852
        %v1854 = vpop.f32.mrb[0].mxu0
        %v1855 = vadd.f32 %v1491, %v1854
        %1856 = vmatprep.mubr.bf16.mxu0 %v1391
        %1857 = vmatmul.mubr.bf16.gmra.mrb[0].mxu0 %v1390
        %v1858 = vpop.f32.mrb[0].mxu0
        %v1859 = vadd.f32 %v1487, %v1858
        %v1860 = vpop.f32.mrb[0].mxu0
        %v1861 = vadd.f32 %v1491, %v1860
        %v1862 = vpop.f32.mrb[0].mxu0
        %v1863 = vadd.f32 %v1487, %v1862
        %v1864 = vpop.f32.mrb[0].mxu0
        %v1865 = vadd.f32 %v1491, %v1864
        %1866 = vmatprep.mubr.bf16.mxu0 %v1395
        %1867 = vmatmul.mubr.bf16.gmra.mrb[0].mxu0 %v1394
        %v1868 = vpop.f32.mrb[0].mxu0
        %v1869 = vadd.f32 %v1487, %v1868
        %v1870 = vpop.f32.mrb[0].mxu0
        %v1871 = vadd.f32 %v1491, %v1870
        %v1872 = vpop.f32.mrb[0].mxu0
        %v1873 = vadd.f32 %v1487, %v1872
        %v1874 = vpop.f32.mrb[0].mxu0
        %v1875 = vadd.f32 %v1491, %v1874
        %1876 = vmatprep.mubr.bf16.mxu0 %v1399
        %1877 = vmatmul.mubr.bf16.gmra.mrb[0].mxu0 %v1398
        %v1878 = vpop.f32.mrb[0].mxu0
        %v1879 = vadd.f32 %v1487, %v1878
        %v1880 = vpop.f32.mrb[0].mxu0
        %v1881 = vadd.f32 %v1491, %v1880
        %v1882 = vpop.f32.mrb[0].mxu0
        %v1883 = vadd.f32 %v1487, %v1882
        %v1884 = vpop.f32.mrb[0].mxu0
        %v1885 = vadd.f32 %v1491, %v1884
        %1886 = vmatprep.mubr.bf16.mxu0 %v1403
        %1887 = vmatmul.mubr.bf16.gmra.mrb[0].mxu0 %v1402
        %v1888 = vpop.f32.mrb[0].mxu0
        %v1889 = vadd.f32 %v1487, %v1888
        %v1890 = vpop.f32.mrb[0].mxu0
        %v1891 = vadd.f32 %v1491, %v1890
        %v1892 = vpop.f32.mrb[0].mxu0
        %v1893 = vadd.f32 %v1487, %v1892
        %v1894 = vpop.f32.mrb[0].mxu0
        %v1895 = vadd.f32 %v1491, %v1894
        %1896 = vmatprep.mubr.bf16.mxu0 %v1407
        %1897 = vmatmul.mubr.bf16.gmra.mrb[0].mxu0 %v1406
        %v1898 = vpop.f32.mrb[0].mxu0
        %v1899 = vadd.f32 %v1487, %v1898
        %v1900 = vpop.f32.mrb[0].mxu0
        %v1901 = vadd.f32 %v1491, %v1900
        %v1902 = vpop.f32.mrb[0].mxu0
        %v1903 = vadd.f32 %v1487, %v1902
        %v1904 = vpop.f32.mrb[0].mxu0
        %v1905 = vadd.f32 %v1491, %v1904
        %1906 = vmatprep.mubr.bf16.mxu0 %v1411
        %1907 = vmatmul.mubr.bf16.gmra.mrb[0].mxu0 %v1410
        %v1908 = vpop.f32.mrb[0].mxu0
        %v1909 = vadd.f32 %v1487, %v1908
        %v1910 = vpop.f32.mrb[0].mxu0
        %v1911 = vadd.f32 %v1491, %v1910
        %v1912 = vpop.f32.mrb[0].mxu0
        %v1913 = vadd.f32 %v1487, %v1912
        %v1914 = vpop.f32.mrb[0].mxu0
        %v1915 = vadd.f32 %v1491, %v1914
        %1916 = vmatprep.mubr.bf16.mxu0 %v1415
        %1917 = vmatmul.mubr.bf16.gmra.mrb[0].mxu0 %v1414
        %v1918 = vpop.f32.mrb[0].mxu0
        %v1919 = vadd.f32 %v1487, %v1918
        %v1920 = vpop.f32.mrb[0].mxu0
        %v1921 = vadd.f32 %v1491, %v1920
        %v1922 = vpop.f32.mrb[0].mxu0
        %v1923 = vadd.f32 %v1487, %v1922
        %v1924 = vpop.f32.mrb[0].mxu0
        %v1925 = vadd.f32 %v1491, %v1924
        %1926 = vdwg.mxu0
        %1927 = vmatprep.subr.bf16.mxu0 %v1719
        %1928 = vmatpush1.bf16.msra.mxu0 %v1718
        %1929 = vmatprep.subr.bf16.mxu0 %v1721
        %1930 = vmatpush1.bf16.msra.mxu0 %v1720
        %1931 = vmatprep.subr.bf16.mxu0 %v1723
        %1932 = vmatpush1.bf16.msra.mxu0 %v1722
        %1933 = vmatprep.subr.bf16.mxu0 %v1725
        %1934 = vmatpush1.bf16.msra.mxu0 %v1724
        %1935 = vmatprep.subr.bf16.mxu0 %v1727
        %1936 = vmatpush1.bf16.msra.mxu0 %v1726
        %1937 = vmatprep.subr.bf16.mxu0 %v1729
        %1938 = vmatpush1.bf16.msra.mxu0 %v1728
        %1939 = vmatprep.subr.bf16.mxu0 %v1731
        %1940 = vmatpush1.bf16.msra.mxu0 %v1730
        %1941 = vmatprep.subr.bf16.mxu0 %v1733
        %1942 = vmatpush1.bf16.msra.mxu0 %v1732
        %1943 = vmatprep.subr.bf16.mxu0 %v1735
        %1944 = vmatpush1.bf16.msra.mxu0 %v1734
        %1945 = vmatprep.subr.bf16.mxu0 %v1737
        %1946 = vmatpush1.bf16.msra.mxu0 %v1736
        %1947 = vmatprep.subr.bf16.mxu0 %v1739
        %1948 = vmatpush1.bf16.msra.mxu0 %v1738
        %1949 = vmatprep.subr.bf16.mxu0 %v1741
        %1950 = vmatpush1.bf16.msra.mxu0 %v1740
        %1951 = vmatprep.subr.bf16.mxu0 %v1743
        %1952 = vmatpush1.bf16.msra.mxu0 %v1742
        %1953 = vmatprep.subr.bf16.mxu0 %v1745
        %1954 = vmatpush1.bf16.msra.mxu0 %v1744
        %1955 = vmatprep.subr.bf16.mxu0 %v1747
        %1956 = vmatpush1.bf16.msra.mxu0 %v1746
        %1957 = vmatprep.subr.bf16.mxu0 %v1749
        %1958 = vmatpush1.bf16.msra.mxu0 %v1748
        %1959 = vmatprep.mubr.bf16.mxu0 %v1389
        %1960 = vmatmul.mubr.bf16.gmra.mrb[0].mxu0 %v1388
        %v1961 = vpop.f32.mrb[0].mxu0
        %v1962 = vadd.f32 %v1849, %v1961
        %v1963 = vpop.f32.mrb[0].mxu0
        %v1964 = vadd.f32 %v1851, %v1963
        %v1965 = vpop.f32.mrb[0].mxu0
        %v1966 = vadd.f32 %v1853, %v1965
        %v1967 = vpop.f32.mrb[0].mxu0
        %v1968 = vadd.f32 %v1855, %v1967
        %1969 = vmatprep.mubr.bf16.mxu0 %v1393
        %1970 = vmatmul.mubr.bf16.gmra.mrb[0].mxu0 %v1392
        %v1971 = vpop.f32.mrb[0].mxu0
        %v1972 = vadd.f32 %v1859, %v1971
        %v1973 = vpop.f32.mrb[0].mxu0
        %v1974 = vadd.f32 %v1861, %v1973
        %v1975 = vpop.f32.mrb[0].mxu0
        %v1976 = vadd.f32 %v1863, %v1975
        %v1977 = vpop.f32.mrb[0].mxu0
        %v1978 = vadd.f32 %v1865, %v1977
        %1979 = vmatprep.mubr.bf16.mxu0 %v1397
        %1980 = vmatmul.mubr.bf16.gmra.mrb[0].mxu0 %v1396
        %v1981 = vpop.f32.mrb[0].mxu0
        %v1982 = vadd.f32 %v1869, %v1981
        %v1983 = vpop.f32.mrb[0].mxu0
        %v1984 = vadd.f32 %v1871, %v1983
        %v1985 = vpop.f32.mrb[0].mxu0
        %v1986 = vadd.f32 %v1873, %v1985
        %v1987 = vpop.f32.mrb[0].mxu0
        %v1988 = vadd.f32 %v1875, %v1987
        %1989 = vmatprep.mubr.bf16.mxu0 %v1401
        %1990 = vmatmul.mubr.bf16.gmra.mrb[0].mxu0 %v1400
        %v1991 = vpop.f32.mrb[0].mxu0
        %v1992 = vadd.f32 %v1879, %v1991
        %v1993 = vpop.f32.mrb[0].mxu0
        %v1994 = vadd.f32 %v1881, %v1993
        %v1995 = vpop.f32.mrb[0].mxu0
        %v1996 = vadd.f32 %v1883, %v1995
        %v1997 = vpop.f32.mrb[0].mxu0
        %v1998 = vadd.f32 %v1885, %v1997
        %1999 = vmatprep.mubr.bf16.mxu0 %v1405
        %2000 = vmatmul.mubr.bf16.gmra.mrb[0].mxu0 %v1404
        %v2001 = vpop.f32.mrb[0].mxu0
        %v2002 = vadd.f32 %v1889, %v2001
        %v2003 = vpop.f32.mrb[0].mxu0
        %v2004 = vadd.f32 %v1891, %v2003
        %v2005 = vpop.f32.mrb[0].mxu0
        %v2006 = vadd.f32 %v1893, %v2005
        %v2007 = vpop.f32.mrb[0].mxu0
        %v2008 = vadd.f32 %v1895, %v2007
        %2009 = vmatprep.mubr.bf16.mxu0 %v1409
        %2010 = vmatmul.mubr.bf16.gmra.mrb[0].mxu0 %v1408
        %v2011 = vpop.f32.mrb[0].mxu0
        %v2012 = vadd.f32 %v1899, %v2011
        %v2013 = vpop.f32.mrb[0].mxu0
        %v2014 = vadd.f32 %v1901, %v2013
        %v2015 = vpop.f32.mrb[0].mxu0
        %v2016 = vadd.f32 %v1903, %v2015
        %v2017 = vpop.f32.mrb[0].mxu0
        %v2018 = vadd.f32 %v1905, %v2017
        %2019 = vmatprep.mubr.bf16.mxu0 %v1413
        %2020 = vmatmul.mubr.bf16.gmra.mrb[0].mxu0 %v1412
        %v2021 = vpop.f32.mrb[0].mxu0
        %v2022 = vadd.f32 %v1909, %v2021
        %v2023 = vpop.f32.mrb[0].mxu0
        %v2024 = vadd.f32 %v1911, %v2023
        %v2025 = vpop.f32.mrb[0].mxu0
        %v2026 = vadd.f32 %v1913, %v2025
        %v2027 = vpop.f32.mrb[0].mxu0
        %v2028 = vadd.f32 %v1915, %v2027
        %2029 = vmatprep.mubr.bf16.mxu0 %v1417
        %2030 = vmatmul.mubr.bf16.gmra.mrb[0].mxu0 %v1416
        %v2031 = vpop.f32.mrb[0].mxu0
        %v2032 = vadd.f32 %v1919, %v2031
        %v2033 = vpop.f32.mrb[0].mxu0
        %v2034 = vadd.f32 %v1921, %v2033
        %v2035 = vpop.f32.mrb[0].mxu0
        %v2036 = vadd.f32 %v1923, %v2035
        %v2037 = vpop.f32.mrb[0].mxu0
        %v2038 = vadd.f32 %v1925, %v2037
        %2039 = vdwg.mxu0
        %v2040 = vmax.f32 %v1962, 0.0
        %v2041 = vmax.f32 %v1964, 0.0
        %v2042 = vmax.f32 %v1966, 0.0
        %v2043 = vmax.f32 %v1968, 0.0
        %v2044 = vmax.f32 %v1972, 0.0
        %v2045 = vmax.f32 %v1974, 0.0
        %v2046 = vmax.f32 %v1976, 0.0
        %v2047 = vmax.f32 %v1978, 0.0
        %v2048 = vmax.f32 %v1982, 0.0
        %v2049 = vmax.f32 %v1984, 0.0
        %v2050 = vmax.f32 %v1986, 0.0
        %v2051 = vmax.f32 %v1988, 0.0
        %v2052 = vmax.f32 %v1992, 0.0
        %v2053 = vmax.f32 %v1994, 0.0
        %v2054 = vmax.f32 %v1996, 0.0
        %v2055 = vmax.f32 %v1998, 0.0
        %v2056 = vmax.f32 %v2002, 0.0
        %v2057 = vmax.f32 %v2004, 0.0
        %v2058 = vmax.f32 %v2006, 0.0
        %v2059 = vmax.f32 %v2008, 0.0
        %v2060 = vmax.f32 %v2012, 0.0
        %v2061 = vmax.f32 %v2014, 0.0
        %v2062 = vmax.f32 %v2016, 0.0
        %v2063 = vmax.f32 %v2018, 0.0
        %v2064 = vmax.f32 %v2022, 0.0
        %v2065 = vmax.f32 %v2024, 0.0
        %v2066 = vmax.f32 %v2026, 0.0
        %v2067 = vmax.f32 %v2028, 0.0
        %v2068 = vmax.f32 %v2032, 0.0
        %v2069 = vmax.f32 %v2034, 0.0
        %v2070 = vmax.f32 %v2036, 0.0
        %v2071 = vmax.f32 %v2038, 0.0
        %v2072 = vpack.c.bf16 %v1292, %v1290
        %v2073 = vpack.c.bf16 %v1293, %v1291
        %v2074 = vpack.c.bf16 %v1296, %v1294
        %v2075 = vpack.c.bf16 %v1297, %v1295
        %v2076 = vpack.c.bf16 %v1300, %v1298
        %v2077 = vpack.c.bf16 %v1301, %v1299
        %v2078 = vpack.c.bf16 %v1304, %v1302
        %v2079 = vpack.c.bf16 %v1305, %v1303
        %v2080 = vpack.c.bf16 %v1308, %v1306
        %v2081 = vpack.c.bf16 %v1309, %v1307
        %v2082 = vpack.c.bf16 %v1312, %v1310
        %v2083 = vpack.c.bf16 %v1313, %v1311
        %v2084 = vpack.c.bf16 %v1316, %v1314
        %v2085 = vpack.c.bf16 %v1317, %v1315
        %v2086 = vpack.c.bf16 %v1320, %v1318
        %v2087 = vpack.c.bf16 %v1321, %v1319
        %v2088 = vld [vmem:[%s7] sm:$0xf]
        %v2089 = vld [vmem:[%s7 + $0x4] sm:$0xf]
        %v2090 = vld [vmem:[%s7 + $0x8] sm:$0xf]
        %v2091 = vld [vmem:[%s7 + $0xc] sm:$0xf]
        %v2092 = vld [vmem:[%s7 + $0x10] sm:$0xf]
        %v2093 = vld [vmem:[%s7 + $0x14] sm:$0xf]
        %v2094 = vld [vmem:[%s7 + $0x18] sm:$0xf]
        %v2095 = vld [vmem:[%s7 + $0x1c] sm:$0xf]
        %v2096 = vld [vmem:[%s7 + $0x20] sm:$0xf]
        %v2097 = vld [vmem:[%s7 + $0x24] sm:$0xf]
        %v2098 = vld [vmem:[%s7 + $0x28] sm:$0xf]
        %v2099 = vld [vmem:[%s7 + $0x2c] sm:$0xf]
        %v2100 = vld [vmem:[%s7 + $0x30] sm:$0xf]
        %v2101 = vld [vmem:[%s7 + $0x34] sm:$0xf]
        %v2102 = vld [vmem:[%s7 + $0x38] sm:$0xf]
        %v2103 = vld [vmem:[%s7 + $0x3c] sm:$0xf]
        %v2104 = vld [vmem:[%s7 + $0x40] sm:$0xf]
        %v2105 = vld [vmem:[%s7 + $0x44] sm:$0xf]
        %v2106 = vld [vmem:[%s7 + $0x48] sm:$0xf]
        %v2107 = vld [vmem:[%s7 + $0x4c] sm:$0xf]
        %v2108 = vld [vmem:[%s7 + $0x50] sm:$0xf]
        %v2109 = vld [vmem:[%s7 + $0x54] sm:$0xf]
        %v2110 = vld [vmem:[%s7 + $0x58] sm:$0xf]
        %v2111 = vld [vmem:[%s7 + $0x5c] sm:$0xf]
        %v2112 = vld [vmem:[%s7 + $0x60] sm:$0xf]
        %v2113 = vld [vmem:[%s7 + $0x64] sm:$0xf]
        %v2114 = vld [vmem:[%s7 + $0x68] sm:$0xf]
        %v2115 = vld [vmem:[%s7 + $0x6c] sm:$0xf]
        %v2116 = vld [vmem:[%s7 + $0x70] sm:$0xf]
        %v2117 = vld [vmem:[%s7 + $0x74] sm:$0xf]
        %v2118 = vld [vmem:[%s7 + $0x78] sm:$0xf]
        %v2119 = vld [vmem:[%s7 + $0x7c] sm:$0xf]
        %v2120 = vpack.c.bf16 %v2042, %v2040
        %v2121 = vpack.c.bf16 %v2043, %v2041
        %v2122 = vpack.c.bf16 %v2046, %v2044
        %v2123 = vpack.c.bf16 %v2047, %v2045
        %v2124 = vpack.c.bf16 %v2050, %v2048
        %v2125 = vpack.c.bf16 %v2051, %v2049
        %v2126 = vpack.c.bf16 %v2054, %v2052
        %v2127 = vpack.c.bf16 %v2055, %v2053
        %v2128 = vpack.c.bf16 %v2058, %v2056
        %v2129 = vpack.c.bf16 %v2059, %v2057
        %v2130 = vpack.c.bf16 %v2062, %v2060
        %v2131 = vpack.c.bf16 %v2063, %v2061
        %v2132 = vpack.c.bf16 %v2066, %v2064
        %v2133 = vpack.c.bf16 %v2067, %v2065
        %v2134 = vpack.c.bf16 %v2070, %v2068
        %v2135 = vpack.c.bf16 %v2071, %v2069
        %v2136 = vld [vmem:[%s8] sm:$0xf]
        %v2137 = vld [vmem:[%s8 + $0x4] sm:$0xf]
        %v2138 = vld [vmem:[%s8 + $0x8] sm:$0xf]
        %v2139 = vld [vmem:[%s8 + $0xc] sm:$0xf]
        %v2140 = vld [vmem:[%s8 + $0x10] sm:$0xf]
        %v2141 = vld [vmem:[%s8 + $0x14] sm:$0xf]
        %v2142 = vld [vmem:[%s8 + $0x18] sm:$0xf]
        %v2143 = vld [vmem:[%s8 + $0x1c] sm:$0xf]
        %v2144 = vld [vmem:[%s8 + $0x20] sm:$0xf]
        %v2145 = vld [vmem:[%s8 + $0x24] sm:$0xf]
        %v2146 = vld [vmem:[%s8 + $0x28] sm:$0xf]
        %v2147 = vld [vmem:[%s8 + $0x2c] sm:$0xf]
        %v2148 = vld [vmem:[%s8 + $0x30] sm:$0xf]
        %v2149 = vld [vmem:[%s8 + $0x34] sm:$0xf]
        %v2150 = vld [vmem:[%s8 + $0x38] sm:$0xf]
        %v2151 = vld [vmem:[%s8 + $0x3c] sm:$0xf]
        %v2152 = vld [vmem:[%s8 + $0x40] sm:$0xf]
        %v2153 = vld [vmem:[%s8 + $0x44] sm:$0xf]
        %v2154 = vld [vmem:[%s8 + $0x48] sm:$0xf]
        %v2155 = vld [vmem:[%s8 + $0x4c] sm:$0xf]
        %v2156 = vld [vmem:[%s8 + $0x50] sm:$0xf]
        %v2157 = vld [vmem:[%s8 + $0x54] sm:$0xf]
        %v2158 = vld [vmem:[%s8 + $0x58] sm:$0xf]
        %v2159 = vld [vmem:[%s8 + $0x5c] sm:$0xf]
        %v2160 = vld [vmem:[%s8 + $0x60] sm:$0xf]
        %v2161 = vld [vmem:[%s8 + $0x64] sm:$0xf]
        %v2162 = vld [vmem:[%s8 + $0x68] sm:$0xf]
        %v2163 = vld [vmem:[%s8 + $0x6c] sm:$0xf]
        %v2164 = vld [vmem:[%s8 + $0x70] sm:$0xf]
        %v2165 = vld [vmem:[%s8 + $0x74] sm:$0xf]
        %v2166 = vld [vmem:[%s8 + $0x78] sm:$0xf]
        %v2167 = vld [vmem:[%s8 + $0x7c] sm:$0xf]
        %v2200 = vunpack.c.l.b16 %v2136
        %v2201 = vunpack.c.l.b16 %v2137
        %v2202 = vunpack.c.l.b16 %v2138
        %v2203 = vunpack.c.l.b16 %v2139
        %v2204 = vunpack.c.l.b16 %v2140
        %v2205 = vunpack.c.l.b16 %v2141
        %v2206 = vunpack.c.l.b16 %v2142
        %v2207 = vunpack.c.l.b16 %v2143
        %v2208 = vunpack.c.l.b16 %v2144
        %v2209 = vunpack.c.l.b16 %v2145
        %v2210 = vunpack.c.l.b16 %v2146
        %v2211 = vunpack.c.l.b16 %v2147
        %v2212 = vunpack.c.l.b16 %v2148
        %v2213 = vunpack.c.l.b16 %v2149
        %v2214 = vunpack.c.l.b16 %v2150
        %v2215 = vunpack.c.l.b16 %v2151
        %v2216 = vunpack.c.l.b16 %v2152
        %v2217 = vunpack.c.l.b16 %v2153
        %v2218 = vunpack.c.l.b16 %v2154
        %v2219 = vunpack.c.l.b16 %v2155
        %v2220 = vunpack.c.l.b16 %v2156
        %v2221 = vunpack.c.l.b16 %v2157
        %v2222 = vunpack.c.l.b16 %v2158
        %v2223 = vunpack.c.l.b16 %v2159
        %v2224 = vunpack.c.l.b16 %v2160
        %v2225 = vunpack.c.l.b16 %v2161
        %v2226 = vunpack.c.l.b16 %v2162
        %v2227 = vunpack.c.l.b16 %v2163
        %v2228 = vunpack.c.l.b16 %v2164
        %v2229 = vunpack.c.l.b16 %v2165
        %v2230 = vunpack.c.l.b16 %v2166
        %v2231 = vunpack.c.l.b16 %v2167
        %v2232 = vpack.c.b16 %v2201, %v2200
        %v2233 = vpack.c.b16 %v2203, %v2202
        %v2234 = vpack.c.b16 %v2205, %v2204
        %v2235 = vpack.c.b16 %v2207, %v2206
        %v2236 = vpack.c.b16 %v2209, %v2208
        %v2237 = vpack.c.b16 %v2211, %v2210
        %v2238 = vpack.c.b16 %v2213, %v2212
        %v2239 = vpack.c.b16 %v2215, %v2214
        %v2240 = vpack.c.b16 %v2217, %v2216
        %v2241 = vpack.c.b16 %v2219, %v2218
        %v2242 = vpack.c.b16 %v2221, %v2220
        %v2243 = vpack.c.b16 %v2223, %v2222
        %v2244 = vpack.c.b16 %v2225, %v2224
        %v2245 = vpack.c.b16 %v2227, %v2226
        %v2246 = vpack.c.b16 %v2229, %v2228
        %v2247 = vpack.c.b16 %v2231, %v2230
        %2264 = vmatprep.subr.bf16.mxu0 0
        %2265 = vmatpush1.bf16.msra.mxu0 %v2232
        %2266 = vmatprep.subr.bf16.mxu0 0
        %2267 = vmatpush1.bf16.msra.mxu0 %v2233
        %2268 = vmatprep.subr.bf16.mxu0 0
        %2269 = vmatpush1.bf16.msra.mxu0 %v2234
        %2270 = vmatprep.subr.bf16.mxu0 0
        %2271 = vmatpush1.bf16.msra.mxu0 %v2235
        %2272 = vmatprep.subr.bf16.mxu0 0
        %2273 = vmatpush1.bf16.msra.mxu0 %v2236
        %2274 = vmatprep.subr.bf16.mxu0 0
        %2275 = vmatpush1.bf16.msra.mxu0 %v2237
        %2276 = vmatprep.subr.bf16.mxu0 0
        %2277 = vmatpush1.bf16.msra.mxu0 %v2238
        %2278 = vmatprep.subr.bf16.mxu0 0
        %2279 = vmatpush1.bf16.msra.mxu0 %v2239
        %2280 = vmatprep.subr.bf16.mxu0 0
        %2281 = vmatpush1.bf16.msra.mxu0 %v2240
        %2282 = vmatprep.subr.bf16.mxu0 0
        %2283 = vmatpush1.bf16.msra.mxu0 %v2241
        %2284 = vmatprep.subr.bf16.mxu0 0
        %2285 = vmatpush1.bf16.msra.mxu0 %v2242
        %2286 = vmatprep.subr.bf16.mxu0 0
        %2287 = vmatpush1.bf16.msra.mxu0 %v2243
        %2288 = vmatprep.subr.bf16.mxu0 0
        %2289 = vmatpush1.bf16.msra.mxu0 %v2244
        %2290 = vmatprep.subr.bf16.mxu0 0
        %2291 = vmatpush1.bf16.msra.mxu0 %v2245
        %2292 = vmatprep.subr.bf16.mxu0 0
        %2293 = vmatpush1.bf16.msra.mxu0 %v2246
        %2294 = vmatprep.subr.bf16.mxu0 0
        %2295 = vmatpush1.bf16.msra.mxu0 %v2247
        %2296 = vmatprep.mubr.bf16.mxu0 %v2121
        %2297 = vmatmul.mubr.bf16.gmra.mrb[0].mxu0 %v2120
        %v2298 = vpop.f32.mrb[0].mxu0
        %v2299 = vadd.f32 0.0, %v2298
        %v2300 = vpop.f32.mrb[0].mxu0
        %v2301 = vpop.f32.mrb[0].mxu0
        %v2302 = vadd.f32 0.0, %v2301
        %v2303 = vpop.f32.mrb[0].mxu0
        %2304 = vmatprep.mubr.bf16.mxu0 %v2123
        %2305 = vmatmul.mubr.bf16.gmra.mrb[0].mxu0 %v2122
        %v2306 = vpop.f32.mrb[0].mxu0
        %v2307 = vadd.f32 0.0, %v2306
        %v2308 = vpop.f32.mrb[0].mxu0
        %v2309 = vpop.f32.mrb[0].mxu0
        %v2310 = vadd.f32 0.0, %v2309
        %v2311 = vpop.f32.mrb[0].mxu0
        %2312 = vmatprep.mubr.bf16.mxu0 %v2125
        %2313 = vmatmul.mubr.bf16.gmra.mrb[0].mxu0 %v2124
        %v2314 = vpop.f32.mrb[0].mxu0
        %v2315 = vadd.f32 0.0, %v2314
        %v2316 = vpop.f32.mrb[0].mxu0
        %v2317 = vpop.f32.mrb[0].mxu0
        %v2318 = vadd.f32 0.0, %v2317
        %v2319 = vpop.f32.mrb[0].mxu0
        %2320 = vmatprep.mubr.bf16.mxu0 %v2127
        %2321 = vmatmul.mubr.bf16.gmra.mrb[0].mxu0 %v2126
        %v2322 = vpop.f32.mrb[0].mxu0
        %v2323 = vadd.f32 0.0, %v2322
        %v2324 = vpop.f32.mrb[0].mxu0
        %v2325 = vpop.f32.mrb[0].mxu0
        %v2326 = vadd.f32 0.0, %v2325
        %v2327 = vpop.f32.mrb[0].mxu0
        %2328 = vmatprep.mubr.bf16.mxu0 %v2129
        %2329 = vmatmul.mubr.bf16.gmra.mrb[0].mxu0 %v2128
        %v2330 = vpop.f32.mrb[0].mxu0
        %v2331 = vadd.f32 0.0, %v2330
        %v2332 = vpop.f32.mrb[0].mxu0
        %v2333 = vpop.f32.mrb[0].mxu0
        %v2334 = vadd.f32 0.0, %v2333
        %v2335 = vpop.f32.mrb[0].mxu0
        %2336 = vmatprep.mubr.bf16.mxu0 %v2131
        %2337 = vmatmul.mubr.bf16.gmra.mrb[0].mxu0 %v2130
        %v2338 = vpop.f32.mrb[0].mxu0
        %v2339 = vadd.f32 0.0, %v2338
        %v2340 = vpop.f32.mrb[0].mxu0
        %v2341 = vpop.f32.mrb[0].mxu0
        %v2342 = vadd.f32 0.0, %v2341
        %v2343 = vpop.f32.mrb[0].mxu0
        %2344 = vmatprep.mubr.bf16.mxu0 %v2133
        %2345 = vmatmul.mubr.bf16.gmra.mrb[0].mxu0 %v2132
        %v2346 = vpop.f32.mrb[0].mxu0
        %v2347 = vadd.f32 0.0, %v2346
        %v2348 = vpop.f32.mrb[0].mxu0
        %v2349 = vpop.f32.mrb[0].mxu0
        %v2350 = vadd.f32 0.0, %v2349
        %v2351 = vpop.f32.mrb[0].mxu0
        %2352 = vmatprep.mubr.bf16.mxu0 %v2135
        %2353 = vmatmul.mubr.bf16.gmra.mrb[0].mxu0 %v2134
        %v2354 = vpop.f32.mrb[0].mxu0
        %v2355 = vadd.f32 0.0, %v2354
        %v2356 = vpop.f32.mrb[0].mxu0
        %v2357 = vpop.f32.mrb[0].mxu0
        %v2358 = vadd.f32 0.0, %v2357
        %v2359 = vpop.f32.mrb[0].mxu0
        %2360 = vdwg.mxu0
        %v2393 = vunpack.c.l.b16 %v2088
        %v2394 = vunpack.c.l.b16 %v2089
        %v2395 = vunpack.c.l.b16 %v2090
        %v2396 = vunpack.c.l.b16 %v2091
        %v2397 = vunpack.c.l.b16 %v2092
        %v2398 = vunpack.c.l.b16 %v2093
        %v2399 = vunpack.c.l.b16 %v2094
        %v2400 = vunpack.c.l.b16 %v2095
        %v2401 = vunpack.c.l.b16 %v2096
        %v2402 = vunpack.c.l.b16 %v2097
        %v2403 = vunpack.c.l.b16 %v2098
        %v2404 = vunpack.c.l.b16 %v2099
        %v2405 = vunpack.c.l.b16 %v2100
        %v2406 = vunpack.c.l.b16 %v2101
        %v2407 = vunpack.c.l.b16 %v2102
        %v2408 = vunpack.c.l.b16 %v2103
        %v2409 = vunpack.c.l.b16 %v2104
        %v2410 = vunpack.c.l.b16 %v2105
        %v2411 = vunpack.c.l.b16 %v2106
        %v2412 = vunpack.c.l.b16 %v2107
        %v2413 = vunpack.c.l.b16 %v2108
        %v2414 = vunpack.c.l.b16 %v2109
        %v2415 = vunpack.c.l.b16 %v2110
        %v2416 = vunpack.c.l.b16 %v2111
        %v2417 = vunpack.c.l.b16 %v2112
        %v2418 = vunpack.c.l.b16 %v2113
        %v2419 = vunpack.c.l.b16 %v2114
        %v2420 = vunpack.c.l.b16 %v2115
        %v2421 = vunpack.c.l.b16 %v2116
        %v2422 = vunpack.c.l.b16 %v2117
        %v2423 = vunpack.c.l.b16 %v2118
        %v2424 = vunpack.c.l.b16 %v2119
        %v2425 = vpack.c.b16 %v2394, %v2393
        %v2426 = vpack.c.b16 %v2396, %v2395
        %v2427 = vpack.c.b16 %v2398, %v2397
        %v2428 = vpack.c.b16 %v2400, %v2399
        %v2429 = vpack.c.b16 %v2402, %v2401
        %v2430 = vpack.c.b16 %v2404, %v2403
        %v2431 = vpack.c.b16 %v2406, %v2405
        %v2432 = vpack.c.b16 %v2408, %v2407
        %v2433 = vpack.c.b16 %v2410, %v2409
        %v2434 = vpack.c.b16 %v2412, %v2411
        %v2435 = vpack.c.b16 %v2414, %v2413
        %v2436 = vpack.c.b16 %v2416, %v2415
        %v2437 = vpack.c.b16 %v2418, %v2417
        %v2438 = vpack.c.b16 %v2420, %v2419
        %v2439 = vpack.c.b16 %v2422, %v2421
        %v2440 = vpack.c.b16 %v2424, %v2423
        %2457 = vmatprep.subr.bf16.mxu0 0
        %2458 = vmatpush1.bf16.msra.mxu0 %v2425
        %2459 = vmatprep.subr.bf16.mxu0 0
        %2460 = vmatpush1.bf16.msra.mxu0 %v2426
        %2461 = vmatprep.subr.bf16.mxu0 0
        %2462 = vmatpush1.bf16.msra.mxu0 %v2427
        %2463 = vmatprep.subr.bf16.mxu0 0
        %2464 = vmatpush1.bf16.msra.mxu0 %v2428
        %2465 = vmatprep.subr.bf16.mxu0 0
        %2466 = vmatpush1.bf16.msra.mxu0 %v2429
        %2467 = vmatprep.subr.bf16.mxu0 0
        %2468 = vmatpush1.bf16.msra.mxu0 %v2430
        %2469 = vmatprep.subr.bf16.mxu0 0
        %2470 = vmatpush1.bf16.msra.mxu0 %v2431
        %2471 = vmatprep.subr.bf16.mxu0 0
        %2472 = vmatpush1.bf16.msra.mxu0 %v2432
        %2473 = vmatprep.subr.bf16.mxu0 0
        %2474 = vmatpush1.bf16.msra.mxu0 %v2433
        %2475 = vmatprep.subr.bf16.mxu0 0
        %2476 = vmatpush1.bf16.msra.mxu0 %v2434
        %2477 = vmatprep.subr.bf16.mxu0 0
        %2478 = vmatpush1.bf16.msra.mxu0 %v2435
        %2479 = vmatprep.subr.bf16.mxu0 0
        %2480 = vmatpush1.bf16.msra.mxu0 %v2436
        %2481 = vmatprep.subr.bf16.mxu0 0
        %2482 = vmatpush1.bf16.msra.mxu0 %v2437
        %2483 = vmatprep.subr.bf16.mxu0 0
        %2484 = vmatpush1.bf16.msra.mxu0 %v2438
        %2485 = vmatprep.subr.bf16.mxu0 0
        %2486 = vmatpush1.bf16.msra.mxu0 %v2439
        %2487 = vmatprep.subr.bf16.mxu0 0
        %2488 = vmatpush1.bf16.msra.mxu0 %v2440
        %2489 = vmatprep.mubr.bf16.mxu0 %v2073
        %2490 = vmatmul.mubr.bf16.gmra.mrb[0].mxu0 %v2072
        %v2491 = vpop.f32.mrb[0].mxu0
        %v2492 = vadd.f32 %v2299, %v2491
        %v2493 = vpop.f32.mrb[0].mxu0
        %v2494 = vpop.f32.mrb[0].mxu0
        %v2495 = vadd.f32 %v2302, %v2494
        %v2496 = vpop.f32.mrb[0].mxu0
        %2497 = vmatprep.mubr.bf16.mxu0 %v2075
        %2498 = vmatmul.mubr.bf16.gmra.mrb[0].mxu0 %v2074
        %v2499 = vpop.f32.mrb[0].mxu0
        %v2500 = vadd.f32 %v2307, %v2499
        %v2501 = vpop.f32.mrb[0].mxu0
        %v2502 = vpop.f32.mrb[0].mxu0
        %v2503 = vadd.f32 %v2310, %v2502
        %v2504 = vpop.f32.mrb[0].mxu0
        %2505 = vmatprep.mubr.bf16.mxu0 %v2077
        %2506 = vmatmul.mubr.bf16.gmra.mrb[0].mxu0 %v2076
        %v2507 = vpop.f32.mrb[0].mxu0
        %v2508 = vadd.f32 %v2315, %v2507
        %v2509 = vpop.f32.mrb[0].mxu0
        %v2510 = vpop.f32.mrb[0].mxu0
        %v2511 = vadd.f32 %v2318, %v2510
        %v2512 = vpop.f32.mrb[0].mxu0
        %2513 = vmatprep.mubr.bf16.mxu0 %v2079
        %2514 = vmatmul.mubr.bf16.gmra.mrb[0].mxu0 %v2078
        %v2515 = vpop.f32.mrb[0].mxu0
        %v2516 = vadd.f32 %v2323, %v2515
        %v2517 = vpop.f32.mrb[0].mxu0
        %v2518 = vpop.f32.mrb[0].mxu0
        %v2519 = vadd.f32 %v2326, %v2518
        %v2520 = vpop.f32.mrb[0].mxu0
        %2521 = vmatprep.mubr.bf16.mxu0 %v2081
        %2522 = vmatmul.mubr.bf16.gmra.mrb[0].mxu0 %v2080
        %v2523 = vpop.f32.mrb[0].mxu0
        %v2524 = vadd.f32 %v2331, %v2523
        %v2525 = vpop.f32.mrb[0].mxu0
        %v2526 = vpop.f32.mrb[0].mxu0
        %v2527 = vadd.f32 %v2334, %v2526
        %v2528 = vpop.f32.mrb[0].mxu0
        %2529 = vmatprep.mubr.bf16.mxu0 %v2083
        %2530 = vmatmul.mubr.bf16.gmra.mrb[0].mxu0 %v2082
        %v2531 = vpop.f32.mrb[0].mxu0
        %v2532 = vadd.f32 %v2339, %v2531
        %v2533 = vpop.f32.mrb[0].mxu0
        %v2534 = vpop.f32.mrb[0].mxu0
        %v2535 = vadd.f32 %v2342, %v2534
        %v2536 = vpop.f32.mrb[0].mxu0
        %2537 = vmatprep.mubr.bf16.mxu0 %v2085
        %2538 = vmatmul.mubr.bf16.gmra.mrb[0].mxu0 %v2084
        %v2539 = vpop.f32.mrb[0].mxu0
        %v2540 = vadd.f32 %v2347, %v2539
        %v2541 = vpop.f32.mrb[0].mxu0
        %v2542 = vpop.f32.mrb[0].mxu0
        %v2543 = vadd.f32 %v2350, %v2542
        %v2544 = vpop.f32.mrb[0].mxu0
        %2545 = vmatprep.mubr.bf16.mxu0 %v2087
        %2546 = vmatmul.mubr.bf16.gmra.mrb[0].mxu0 %v2086
        %v2547 = vpop.f32.mrb[0].mxu0
        %v2548 = vadd.f32 %v2355, %v2547
        %v2549 = vpop.f32.mrb[0].mxu0
        %v2550 = vpop.f32.mrb[0].mxu0
        %v2551 = vadd.f32 %v2358, %v2550
        %v2552 = vpop.f32.mrb[0].mxu0
        %2553 = vdwg.mxu0
        %v2554 = vld [vmem:[%s9] sm:$0x1]
        %v2556 = vlaneseq
        %v2557 = vshrl.u32 %v2556, 7
        %v2558 = vsub.s32 0, %v2557
        %v2559 = vrot.slane %v2554, %v2558
        %v2561 = vadd.f32 %v2492, %v2559
        %v2562 = vadd.f32 %v2495, %v2559
        %v2563 = vadd.f32 %v2500, %v2559
        %v2564 = vadd.f32 %v2503, %v2559
        %v2565 = vadd.f32 %v2508, %v2559
        %v2566 = vadd.f32 %v2511, %v2559
        %v2567 = vadd.f32 %v2516, %v2559
        %v2568 = vadd.f32 %v2519, %v2559
        %v2569 = vadd.f32 %v2524, %v2559
        %v2570 = vadd.f32 %v2527, %v2559
        %v2571 = vadd.f32 %v2532, %v2559
        %v2572 = vadd.f32 %v2535, %v2559
        %v2573 = vadd.f32 %v2540, %v2559
        %v2574 = vadd.f32 %v2543, %v2559
        %v2575 = vadd.f32 %v2548, %v2559
        %v2576 = vadd.f32 %v2551, %v2559
        %v2577 = vmax.f32 %v2561, 0.0
        %v2578 = vmax.f32 %v2562, 0.0
        %v2579 = vmax.f32 %v2563, 0.0
        %v2580 = vmax.f32 %v2564, 0.0
        %v2581 = vmax.f32 %v2565, 0.0
        %v2582 = vmax.f32 %v2566, 0.0
        %v2583 = vmax.f32 %v2567, 0.0
        %v2584 = vmax.f32 %v2568, 0.0
        %v2585 = vmax.f32 %v2569, 0.0
        %v2586 = vmax.f32 %v2570, 0.0
        %v2587 = vmax.f32 %v2571, 0.0
        %v2588 = vmax.f32 %v2572, 0.0
        %v2589 = vmax.f32 %v2573, 0.0
        %v2590 = vmax.f32 %v2574, 0.0
        %v2591 = vmax.f32 %v2575, 0.0
        %v2592 = vmax.f32 %v2576, 0.0
        %v2593 = vpack.c.bf16 %v2578, %v2577
        %v2594 = vpack.c.bf16 %v2580, %v2579
        %v2595 = vpack.c.bf16 %v2582, %v2581
        %v2596 = vpack.c.bf16 %v2584, %v2583
        %v2597 = vpack.c.bf16 %v2586, %v2585
        %v2598 = vpack.c.bf16 %v2588, %v2587
        %v2599 = vpack.c.bf16 %v2590, %v2589
        %v2600 = vpack.c.bf16 %v2592, %v2591
        %v2601 = vld [vmem:[%s10] sm:$0xf]
        %v2602 = vld [vmem:[%s10 + $0x4] sm:$0xf]
        %v2603 = vld [vmem:[%s10 + $0x8] sm:$0xf]
        %v2604 = vld [vmem:[%s10 + $0xc] sm:$0xf]
        %v2605 = vld [vmem:[%s10 + $0x10] sm:$0xf]
        %v2606 = vld [vmem:[%s10 + $0x14] sm:$0xf]
        %v2607 = vld [vmem:[%s10 + $0x18] sm:$0xf]
        %v2608 = vld [vmem:[%s10 + $0x1c] sm:$0xf]
        %v2609 = vld [vmem:[%s10 + $0x20] sm:$0xf]
        %v2610 = vld [vmem:[%s10 + $0x24] sm:$0xf]
        %v2611 = vld [vmem:[%s10 + $0x28] sm:$0xf]
        %v2612 = vld [vmem:[%s10 + $0x2c] sm:$0xf]
        %v2613 = vld [vmem:[%s10 + $0x30] sm:$0xf]
        %v2614 = vld [vmem:[%s10 + $0x34] sm:$0xf]
        %v2615 = vld [vmem:[%s10 + $0x38] sm:$0xf]
        %v2616 = vld [vmem:[%s10 + $0x3c] sm:$0xf]
        %v2617 = vld [vmem:[%s11] sm:$0x1]
        %v2619 = vlaneseq
        %v2620 = vshrl.u32 %v2619, 7
        %v2621 = vsub.s32 0, %v2620
        %v2622 = vrot.slane %v2617, %v2621
        %v2640 = vunpack.c.l.b16 %v2601
        %v2641 = vunpack.c.l.b16 %v2602
        %v2642 = vunpack.c.l.b16 %v2603
        %v2643 = vunpack.c.l.b16 %v2604
        %v2644 = vunpack.c.l.b16 %v2605
        %v2645 = vunpack.c.l.b16 %v2606
        %v2646 = vunpack.c.l.b16 %v2607
        %v2647 = vunpack.c.l.b16 %v2608
        %v2648 = vunpack.c.l.b16 %v2609
        %v2649 = vunpack.c.l.b16 %v2610
        %v2650 = vunpack.c.l.b16 %v2611
        %v2651 = vunpack.c.l.b16 %v2612
        %v2652 = vunpack.c.l.b16 %v2613
        %v2653 = vunpack.c.l.b16 %v2614
        %v2654 = vunpack.c.l.b16 %v2615
        %v2655 = vunpack.c.l.b16 %v2616
        %v2656 = vpack.c.b16 %v2641, %v2640
        %v2657 = vpack.c.b16 %v2643, %v2642
        %v2658 = vpack.c.b16 %v2645, %v2644
        %v2659 = vpack.c.b16 %v2647, %v2646
        %v2660 = vpack.c.b16 %v2649, %v2648
        %v2661 = vpack.c.b16 %v2651, %v2650
        %v2662 = vpack.c.b16 %v2653, %v2652
        %v2663 = vpack.c.b16 %v2655, %v2654
        %2672 = vmatprep.subr.bf16.mxu0 0
        %2673 = vmatpush1.bf16.msra.mxu0 %v2656
        %2674 = vmatprep.subr.bf16.mxu0 0
        %2675 = vmatpush1.bf16.msra.mxu0 %v2657
        %2676 = vmatprep.subr.bf16.mxu0 0
        %2677 = vmatpush1.bf16.msra.mxu0 %v2658
        %2678 = vmatprep.subr.bf16.mxu0 0
        %2679 = vmatpush1.bf16.msra.mxu0 %v2659
        %2680 = vmatprep.subr.bf16.mxu0 0
        %2681 = vmatpush1.bf16.msra.mxu0 %v2660
        %2682 = vmatprep.subr.bf16.mxu0 0
        %2683 = vmatpush1.bf16.msra.mxu0 %v2661
        %2684 = vmatprep.subr.bf16.mxu0 0
        %2685 = vmatpush1.bf16.msra.mxu0 %v2662
        %2686 = vmatprep.subr.bf16.mxu0 0
        %2687 = vmatpush1.bf16.msra.mxu0 %v2663
        %2688 = vmatprep.subr.bf16.mxu0 0
        %2689 = vmatpush1.bf16.msra.mxu0 0
        %2690 = vmatprep.subr.bf16.mxu0 0
        %2691 = vmatpush1.bf16.msra.mxu0 0
        %2692 = vmatprep.subr.bf16.mxu0 0
        %2693 = vmatpush1.bf16.msra.mxu0 0
        %2694 = vmatprep.subr.bf16.mxu0 0
        %2695 = vmatpush1.bf16.msra.mxu0 0
        %2696 = vmatprep.subr.bf16.mxu0 0
        %2697 = vmatpush1.bf16.msra.mxu0 0
        %2698 = vmatprep.subr.bf16.mxu0 0
        %2699 = vmatpush1.bf16.msra.mxu0 0
        %2700 = vmatprep.subr.bf16.mxu0 0
        %2701 = vmatpush1.bf16.msra.mxu0 0
        %2702 = vmatprep.subr.bf16.mxu0 0
        %2703 = vmatpush1.bf16.msra.mxu0 0
        %2704 = vmatprep.mubr.bf16.mxu0 0
        %2705 = vmatmul.mubr.bf16.gmra.mrb[0].mxu0 %v2593
        %v2706 = vpop.f32.mrb[0].mxu0
        %v2707 = vadd.f32 %v2622, %v2706
        %v2708 = vpop.f32.mrb[0].mxu0
        %v2709 = vpop.f32.mrb[0].mxu0
        %v2710 = vadd.f32 %v2622, %v2709
        %v2711 = vpop.f32.mrb[0].mxu0
        %2712 = vmatprep.mubr.bf16.mxu0 0
        %2713 = vmatmul.mubr.bf16.gmra.mrb[0].mxu0 %v2594
        %v2714 = vpop.f32.mrb[0].mxu0
        %v2715 = vadd.f32 %v2622, %v2714
        %v2716 = vpop.f32.mrb[0].mxu0
        %v2717 = vpop.f32.mrb[0].mxu0
        %v2718 = vadd.f32 %v2622, %v2717
        %v2719 = vpop.f32.mrb[0].mxu0
        %2720 = vmatprep.mubr.bf16.mxu0 0
        %2721 = vmatmul.mubr.bf16.gmra.mrb[0].mxu0 %v2595
        %v2722 = vpop.f32.mrb[0].mxu0
        %v2723 = vadd.f32 %v2622, %v2722
        %v2724 = vpop.f32.mrb[0].mxu0
        %v2725 = vpop.f32.mrb[0].mxu0
        %v2726 = vadd.f32 %v2622, %v2725
        %v2727 = vpop.f32.mrb[0].mxu0
        %2728 = vmatprep.mubr.bf16.mxu0 0
        %2729 = vmatmul.mubr.bf16.gmra.mrb[0].mxu0 %v2596
        %v2730 = vpop.f32.mrb[0].mxu0
        %v2731 = vadd.f32 %v2622, %v2730
        %v2732 = vpop.f32.mrb[0].mxu0
        %v2733 = vpop.f32.mrb[0].mxu0
        %v2734 = vadd.f32 %v2622, %v2733
        %v2735 = vpop.f32.mrb[0].mxu0
        %2736 = vmatprep.mubr.bf16.mxu0 0
        %2737 = vmatmul.mubr.bf16.gmra.mrb[0].mxu0 %v2597
        %v2738 = vpop.f32.mrb[0].mxu0
        %v2739 = vadd.f32 %v2622, %v2738
        %v2740 = vpop.f32.mrb[0].mxu0
        %v2741 = vpop.f32.mrb[0].mxu0
        %v2742 = vadd.f32 %v2622, %v2741
        %v2743 = vpop.f32.mrb[0].mxu0
        %2744 = vmatprep.mubr.bf16.mxu0 0
        %2745 = vmatmul.mubr.bf16.gmra.mrb[0].mxu0 %v2598
        %v2746 = vpop.f32.mrb[0].mxu0
        %v2747 = vadd.f32 %v2622, %v2746
        %v2748 = vpop.f32.mrb[0].mxu0
        %v2749 = vpop.f32.mrb[0].mxu0
        %v2750 = vadd.f32 %v2622, %v2749
        %v2751 = vpop.f32.mrb[0].mxu0
        %2752 = vmatprep.mubr.bf16.mxu0 0
        %2753 = vmatmul.mubr.bf16.gmra.mrb[0].mxu0 %v2599
        %v2754 = vpop.f32.mrb[0].mxu0
        %v2755 = vadd.f32 %v2622, %v2754
        %v2756 = vpop.f32.mrb[0].mxu0
        %v2757 = vpop.f32.mrb[0].mxu0
        %v2758 = vadd.f32 %v2622, %v2757
        %v2759 = vpop.f32.mrb[0].mxu0
        %2760 = vmatprep.mubr.bf16.mxu0 0
        %2761 = vmatmul.mubr.bf16.gmra.mrb[0].mxu0 %v2600
        %v2762 = vpop.f32.mrb[0].mxu0
        %v2763 = vadd.f32 %v2622, %v2762
        %v2764 = vpop.f32.mrb[0].mxu0
        %v2765 = vpop.f32.mrb[0].mxu0
        %v2766 = vadd.f32 %v2622, %v2765
        %v2767 = vpop.f32.mrb[0].mxu0
        %2768 = vdwg.mxu0
        %v2769 = vld [vmem:[%s557] sm:$0xff]
        %v2770 = vld [vmem:[%s557 + $0x8] sm:$0xff]
        %v2771 = vld [vmem:[%s557 + $0x10] sm:$0xff]
        %v2772 = vld [vmem:[%s557 + $0x18] sm:$0xff]
        %v2773 = vld [vmem:[%s557 + $0x20] sm:$0xff]
        %v2774 = vld [vmem:[%s557 + $0x28] sm:$0xff]
        %v2775 = vld [vmem:[%s557 + $0x30] sm:$0xff]
        %v2776 = vld [vmem:[%s557 + $0x38] sm:$0xff]
        %v2777 = vld [vmem:[%s557 + $0x40] sm:$0xff]
        %v2778 = vld [vmem:[%s557 + $0x48] sm:$0xff]
        %v2779 = vld [vmem:[%s557 + $0x50] sm:$0xff]
        %v2780 = vld [vmem:[%s557 + $0x58] sm:$0xff]
        %v2781 = vld [vmem:[%s557 + $0x60] sm:$0xff]
        %v2782 = vld [vmem:[%s557 + $0x68] sm:$0xff]
        %v2783 = vld [vmem:[%s557 + $0x70] sm:$0xff]
        %v2784 = vld [vmem:[%s557 + $0x78] sm:$0xff]
        %v2785 = vmul.f32 %v2707, 0.5
        %v2786 = vmul.f32 %v2710, 0.5
        %v2787 = vmul.f32 %v2715, 0.5
        %v2788 = vmul.f32 %v2718, 0.5
        %v2789 = vmul.f32 %v2723, 0.5
        %v2790 = vmul.f32 %v2726, 0.5
        %v2791 = vmul.f32 %v2731, 0.5
        %v2792 = vmul.f32 %v2734, 0.5
        %v2793 = vmul.f32 %v2739, 0.5
        %v2794 = vmul.f32 %v2742, 0.5
        %v2795 = vmul.f32 %v2747, 0.5
        %v2796 = vmul.f32 %v2750, 0.5
        %v2797 = vmul.f32 %v2755, 0.5
        %v2798 = vmul.f32 %v2758, 0.5
        %v2799 = vmul.f32 %v2763, 0.5
        %v2800 = vmul.f32 %v2766, 0.5
        %v2801 = vmul.f32 %v2785, 1.442695
        %v2802 = vpow.pop %v2801
        %v2803 = vmul.f32 %v2786, 1.442695
        %v2804 = vpow.pop %v2803
        %v2805 = vmul.f32 %v2787, 1.442695
        %v2806 = vpow.pop %v2805
        %v2807 = vmul.f32 %v2788, 1.442695
        %v2808 = vpow.pop %v2807
        %v2809 = vmul.f32 %v2789, 1.442695
        %v2810 = vpow.pop %v2809
        %v2811 = vmul.f32 %v2790, 1.442695
        %v2812 = vpow.pop %v2811
        %v2813 = vmul.f32 %v2791, 1.442695
        %v2814 = vpow.pop %v2813
        %v2815 = vmul.f32 %v2792, 1.442695
        %v2816 = vpow.pop %v2815
        %v2817 = vmul.f32 %v2793, 1.442695
        %v2818 = vpow.pop %v2817
        %v2819 = vmul.f32 %v2794, 1.442695
        %v2820 = vpow.pop %v2819
        %v2821 = vmul.f32 %v2795, 1.442695
        %v2822 = vpow.pop %v2821
        %v2823 = vmul.f32 %v2796, 1.442695
        %v2824 = vpow.pop %v2823
        %v2825 = vmul.f32 %v2797, 1.442695
        %v2826 = vpow.pop %v2825
        %v2827 = vmul.f32 %v2798, 1.442695
        %v2828 = vpow.pop %v2827
        %v2829 = vmul.f32 %v2799, 1.442695
        %v2830 = vpow.pop %v2829
        %v2831 = vmul.f32 %v2800, 1.442695
        %v2832 = vpow.pop %v2831
        %2849 = vrot.lane.b32.xlu0 %v2802, 64
        %v2850 = vpop.permute.xlu0 %2849
        %2851 = vrot.lane.b32.xlu0 %v2804, 64
        %v2852 = vpop.permute.xlu0 %2851
        %2853 = vrot.lane.b32.xlu0 %v2806, 64
        %v2854 = vpop.permute.xlu0 %2853
        %2855 = vrot.lane.b32.xlu0 %v2808, 64
        %v2856 = vpop.permute.xlu0 %2855
        %2857 = vrot.lane.b32.xlu0 %v2810, 64
        %v2858 = vpop.permute.xlu0 %2857
        %2859 = vrot.lane.b32.xlu0 %v2812, 64
        %v2860 = vpop.permute.xlu0 %2859
        %2861 = vrot.lane.b32.xlu0 %v2814, 64
        %v2862 = vpop.permute.xlu0 %2861
        %2863 = vrot.lane.b32.xlu0 %v2816, 64
        %v2864 = vpop.permute.xlu0 %2863
        %2865 = vrot.lane.b32.xlu0 %v2818, 64
        %v2866 = vpop.permute.xlu0 %2865
        %2867 = vrot.lane.b32.xlu0 %v2820, 64
        %v2868 = vpop.permute.xlu0 %2867
        %2869 = vrot.lane.b32.xlu0 %v2822, 64
        %v2870 = vpop.permute.xlu0 %2869
        %2871 = vrot.lane.b32.xlu0 %v2824, 64
        %v2872 = vpop.permute.xlu0 %2871
        %2873 = vrot.lane.b32.xlu0 %v2826, 64
        %v2874 = vpop.permute.xlu0 %2873
        %2875 = vrot.lane.b32.xlu0 %v2828, 64
        %v2876 = vpop.permute.xlu0 %2875
        %2877 = vrot.lane.b32.xlu0 %v2830, 64
        %v2878 = vpop.permute.xlu0 %2877
        %2879 = vrot.lane.b32.xlu0 %v2832, 64
        %v2880 = vpop.permute.xlu0 %2879
        %v2897 = vmul.f32 %v2769, %v2850
        %v2898 = vmul.f32 %v2770, %v2852
        %v2899 = vmul.f32 %v2771, %v2854
        %v2900 = vmul.f32 %v2772, %v2856
        %v2901 = vmul.f32 %v2773, %v2858
        %v2902 = vmul.f32 %v2774, %v2860
        %v2903 = vmul.f32 %v2775, %v2862
        %v2904 = vmul.f32 %v2776, %v2864
        %v2905 = vmul.f32 %v2777, %v2866
        %v2906 = vmul.f32 %v2778, %v2868
        %v2907 = vmul.f32 %v2779, %v2870
        %v2908 = vmul.f32 %v2780, %v2872
        %v2909 = vmul.f32 %v2781, %v2874
        %v2910 = vmul.f32 %v2782, %v2876
        %v2911 = vmul.f32 %v2783, %v2878
        %v2912 = vmul.f32 %v2784, %v2880
        %v2913 = vadd.f32 %v2707, %v2897
        %v2914 = vadd.f32 %v2710, %v2898
        %v2915 = vadd.f32 %v2715, %v2899
        %v2916 = vadd.f32 %v2718, %v2900
        %v2917 = vadd.f32 %v2723, %v2901
        %v2918 = vadd.f32 %v2726, %v2902
        %v2919 = vadd.f32 %v2731, %v2903
        %v2920 = vadd.f32 %v2734, %v2904
        %v2921 = vadd.f32 %v2739, %v2905
        %v2922 = vadd.f32 %v2742, %v2906
        %v2923 = vadd.f32 %v2747, %v2907
        %v2924 = vadd.f32 %v2750, %v2908
        %v2925 = vadd.f32 %v2755, %v2909
        %v2926 = vadd.f32 %v2758, %v2910
        %v2927 = vadd.f32 %v2763, %v2911
        %v2928 = vadd.f32 %v2766, %v2912
        %2929 = vst [vmem:[%s563] sm:$0xff] %v2707
        %2930 = vst [vmem:[%s563 + $0x8] sm:$0xff] %v2710
        %2931 = vst [vmem:[%s563 + $0x10] sm:$0xff] %v2715
        %2932 = vst [vmem:[%s563 + $0x18] sm:$0xff] %v2718
        %2933 = vst [vmem:[%s563 + $0x20] sm:$0xff] %v2723
        %2934 = vst [vmem:[%s563 + $0x28] sm:$0xff] %v2726
        %2935 = vst [vmem:[%s563 + $0x30] sm:$0xff] %v2731
        %2936 = vst [vmem:[%s563 + $0x38] sm:$0xff] %v2734
        %2937 = vst [vmem:[%s563 + $0x40] sm:$0xff] %v2739
        %2938 = vst [vmem:[%s563 + $0x48] sm:$0xff] %v2742
        %2939 = vst [vmem:[%s563 + $0x50] sm:$0xff] %v2747
        %2940 = vst [vmem:[%s563 + $0x58] sm:$0xff] %v2750
        %2941 = vst [vmem:[%s563 + $0x60] sm:$0xff] %v2755
        %2942 = vst [vmem:[%s563 + $0x68] sm:$0xff] %v2758
        %2943 = vst [vmem:[%s563 + $0x70] sm:$0xff] %v2763
        %2944 = vst [vmem:[%s563 + $0x78] sm:$0xff] %v2766
        %vm2945 = vcmask 523264
        %2946 = vst.msk [vmem:[%s569] sm:$0xff] %vm2945, %v2913
        %2947 = vst.msk [vmem:[%s569 + $0x8] sm:$0xff] %vm2945, %v2914
        %2948 = vst.msk [vmem:[%s569 + $0x10] sm:$0xff] %vm2945, %v2915
        %2949 = vst.msk [vmem:[%s569 + $0x18] sm:$0xff] %vm2945, %v2916
        %2950 = vst.msk [vmem:[%s569 + $0x20] sm:$0xff] %vm2945, %v2917
        %2951 = vst.msk [vmem:[%s569 + $0x28] sm:$0xff] %vm2945, %v2918
        %2952 = vst.msk [vmem:[%s569 + $0x30] sm:$0xff] %vm2945, %v2919
        %2953 = vst.msk [vmem:[%s569 + $0x38] sm:$0xff] %vm2945, %v2920
        %2954 = vst.msk [vmem:[%s569 + $0x40] sm:$0xff] %vm2945, %v2921
        %2955 = vst.msk [vmem:[%s569 + $0x48] sm:$0xff] %vm2945, %v2922
        %2956 = vst.msk [vmem:[%s569 + $0x50] sm:$0xff] %vm2945, %v2923
        %2957 = vst.msk [vmem:[%s569 + $0x58] sm:$0xff] %vm2945, %v2924
        %2958 = vst.msk [vmem:[%s569 + $0x60] sm:$0xff] %vm2945, %v2925
        %2959 = vst.msk [vmem:[%s569 + $0x68] sm:$0xff] %vm2945, %v2926
        %2960 = vst.msk [vmem:[%s569 + $0x70] sm:$0xff] %vm2945, %v2927
        %2961 = vst.msk [vmem:[%s569 + $0x78] sm:$0xff] %vm2945, %v2928
        %s2962 = smul.u32 16, %s32
        %p2963 = scmp.lt.s32.totalorder %s2962, 31
        %s2964 = scalar_select %p2963, %s2962, 31
        %s2965 = smul.addr %s2964, 8
        %s2966 = scalar_lea.vmem %s12, %s2965
        %s2967 = smul.u32 16, %s32
        %p2968 = scmp.lt.s32.totalorder %s2967, 31
        %s2969 = scalar_select %p2968, %s2967, 31
        %s2970 = smul.addr %s2969, 8
        %s2971 = scalar_lea.vmem %s13, %s2970
        // Predicated region
        $region85: #{node_encoder_forward.1} parent=67 // pred_check
          %p2972 = pneg %p317
        $region86: #{node_encoder_forward.1} parent=67 // pred_check_branch
          %2974 = sbr.rel (%p2972) target = $region88
        $region87: #{node_encoder_forward.1} parent=67 // pred_region
          %s2975 = smul.u32 16, %s32
        $region88: #{node_encoder_forward.1} parent=67 // pred_fallthru
          _
        // Predicated region
        $region89: #{node_encoder_forward.1} parent=67 // pred_check
          %p2976 = pneg %p343
        $region90: #{node_encoder_forward.1} parent=67 // pred_check_branch
          %2978 = sbr.rel (%p2976) target = $region92
        $region91: #{node_encoder_forward.1} parent=67 // pred_region
          %s2979 = smul.u32 16, %s32
        $region92: #{node_encoder_forward.1} parent=67 // pred_fallthru
          _
      $region68: #{node_encoder_forward.1} parent=5 // pred_fallthru
        _
      %p2980 = scmp.le.s32.totalorder 2, %s27
      // Predicated region
      $region93: #{node_encoder_forward.1} parent=5 // pred_check
        %p2981 = pneg %p2980
      $region94: #{node_encoder_forward.1} parent=5 // pred_check_branch
        %2983 = sbr.rel (%p2981) target = $region96
      $region95: #{node_encoder_forward.1} parent=5 // pred_region
        %s2984 = ssub.s32 %s27, 2
        // Predicated region
        $region97: #{node_encoder_forward.1} parent=95 // pred_check
          %p2985 = pneg %p323
        $region98: #{node_encoder_forward.1} parent=95 // pred_check_branch
          %2987 = sbr.rel (%p2985) target = $region100
        $region99: #{node_encoder_forward.1} parent=95 // pred_region
          %s2988 = smul.u32 16, %s33
          %p2989 = scmp.lt.s32.totalorder %s2988, 31
          %s2990 = scalar_select %p2989, %s2988, 31
          %s2991 = smul.addr %s2990, 8
          %s2992 = scalar_lea.vmem %s12, %s2991
        $region100: #{node_encoder_forward.1} parent=95 // pred_fallthru
          _
        // Predicated region
        $region101: #{node_encoder_forward.1} parent=95 // pred_check
          %p2993 = pneg %p349
        $region102: #{node_encoder_forward.1} parent=95 // pred_check_branch
          %2995 = sbr.rel (%p2993) target = $region104
        $region103: #{node_encoder_forward.1} parent=95 // pred_region
          %s2996 = smul.u32 16, %s33
          %p2997 = scmp.lt.s32.totalorder %s2996, 31
          %s2998 = scalar_select %p2997, %s2996, 31
          %s2999 = smul.addr %s2998, 8
          %s3000 = scalar_lea.vmem %s13, %s2999
        $region104: #{node_encoder_forward.1} parent=95 // pred_fallthru
          _
      $region96: #{node_encoder_forward.1} parent=5 // pred_fallthru
        _
    $region6: #{node_encoder_forward.1} parent=1 // loop_footer
      %s31 = sadd.s32 1, %s27
    $region7: #{node_encoder_forward.1} parent=1 // loop_footer_branch
      %26 = sbr.rel target = $region3
    $region8: #{node_encoder_forward.1} parent=1 // loop_exit
      _
    %3001 = vsyncpa [#allocation3], 1
    %s3002 = scalar_lea.sflag [#allocation3], 1
    %3003 = vsyncpa %s3002, 1
    %3004 = vsyncpa [#allocation5], 1
    %s3005 = scalar_lea.sflag [#allocation5], 1
    %3006 = vsyncpa %s3005, 1
    %3007 = vsyncpa [#allocation8], 1

</llo_original>
